<compile_context>
chip_gen: v7x
topology: tpu7x:2x2x1
jax: 0.10.0
libtpu: 0.0.40
codegen_flags: <defaults>
</compile_context>

<pallas_src>
import jax
import jax.numpy as jnp
from jax import lax
from jax.experimental import pallas as pl
from jax.experimental.pallas import tpu as pltpu


def _make_edb_kernel(TH, W, C, Co, tail_rows):
    """tail_rows = H % TH (valid rows in the last partial tile), 0 if TH divides H."""

    def kernel(xc_ref, xt_ref, xb_ref, w_ref, w1_ref, b_ref, out_ref, xs_ref):
        # xc_ref : (TH, W, C)        core row block (input dtype)
        # xt_ref : (W, C)            row above the block (clamped at the top border)
        # xb_ref : (W, C)            row below the block (clamped at the bottom border)
        # w_ref  : (9, C)  f32       effective depthwise taps (center tap has -sum(w) folded)
        # w1_ref : (C, Co)           1x1 conv weight (bf16 or f32, picked by the wrapper)
        # b_ref  : (1, Co) f32       1x1 conv bias
        # out_ref: (TH, W, Co)       output row block
        # xs_ref : (TH+2, W, C) f32  halo stack scratch (fully rewritten every grid step)
        h = pl.program_id(1)
        n_h = pl.num_programs(1)

        # ---- build the (TH+2)-row f32 halo stack; every store is full-width/aligned ---
        core = xc_ref[...].astype(jnp.float32)                        # cast once
        xs_ref[1:TH + 1, :, :] = core
        top_ok = (h > 0).astype(jnp.float32)                          # zero at image top
        xs_ref[0, :, :] = xt_ref[...].astype(jnp.float32) * top_ok
        bot_ok = (h < n_h - 1).astype(jnp.float32)                    # zero at image bottom
        xs_ref[TH + 1, :, :] = xb_ref[...].astype(jnp.float32) * bot_ok
        if tail_rows:                                                 # masked tail tile
            @pl.when(h == n_h - 1)
            def _zero_tail():
                xs_ref[1 + tail_rows:TH + 1, :, :] = jnp.zeros(
                    (TH - tail_rows, W, C), jnp.float32)

        # ---- CPDC_3: 9-tap depthwise conv; W-neighbours via XLU rolls + edge masks ----
        xs = xs_ref[...]                                              # (TH+2, W, C) f32
        col = lax.broadcasted_iota(jnp.int32, (1, W, C), 1)
        x_m1 = jnp.where(col > 0, pltpu.roll(xs, shift=1, axis=1), 0.0)          # x[:, j-1]
        x_p1 = jnp.where(col < W - 1, pltpu.roll(xs, shift=W - 1, axis=1), 0.0)  # x[:, j+1]
        stacks = (x_m1, xs, x_p1)                                     # kw = 0, 1, 2

        w = w_ref[...]                                                # (9, C) f32
        acc = None
        for kh in range(3):                                           # free row offsets
            for kw in range(3):
                term = stacks[kw][kh:kh + TH, :, :] * w[kh * 3 + kw]
                acc = term if acc is None else acc + term

        # ---- ReLU6 -> 1x1 conv (MXU channel matmul) -> bias -> residual ---------------
        r = jnp.clip(acc, 0.0, 6.0).reshape(TH * W, C).astype(w1_ref.dtype)
        y = jnp.dot(r, w1_ref[...], preferred_element_type=jnp.float32)   # (TH*W, Co)
        y = y + b_ref[...]
        y = y.reshape(TH, W, Co) + core                               # + Origin
        out_ref[...] = y.astype(out_ref.dtype)

    return kernel


def _vmem_capacity_bytes(default=64 * 1024 * 1024):
    """Physical VMEM per core; falls back to the v7x-safe 64 MiB if unqueryable."""
    try:
        cap = getattr(pltpu.get_tpu_info(), "vmem_capacity_bytes", None)
        return int(cap) if cap else default
    except Exception:
        return default


def _pick_row_tile(H, W, C, Co, in_itemsize, budget_bytes):
    """Largest row tile (<=128) whose per-step VMEM working set fits the budget."""
    per_row = W * (2 * C * in_itemsize          # double-buffered input core block
                   + 2 * Co * in_itemsize       # double-buffered output block
                   + 4 * C * 4                  # f32 halo stack + 2 rolled copies + core
                   + 2 * C * 4                  # acc / clipped activations
                   + 2 * Co * 4)                # matmul result + store staging
    th = int(budget_bytes // max(per_row, 1))
    th = max(8, min(128, th))
    if th > 8:
        th -= th % 8
    return min(H, th)


def edb_block_forward(x_nchw, cpdc_weight, conv1_weight, conv1_bias, *,
                      row_tile=None, mxu_dtype=None):
    """EDB_Block forward.
    x_nchw: (N,C,H,W); cpdc_weight: (C,1,3,3); conv1_weight: (Co,C,1,1); conv1_bias: (Co,)."""
    N, C, H, W = x_nchw.shape
    Co = conv1_weight.shape[0]
    assert cpdc_weight.shape == (C, 1, 3, 3), "CPDC_3 is depthwise (groups = in_channels)"
    assert conv1_weight.shape == (Co, C, 1, 1)
    assert Co == C, "residual x + Origin requires out_features == in_features"

    itemsize = jnp.dtype(x_nchw.dtype).itemsize
    vmem_cap = _vmem_capacity_bytes()
    if row_tile is None:
        row_tile = _pick_row_tile(H, W, C, Co, itemsize, vmem_cap // 2)
    TH = int(min(row_tile, H))
    n_h = -(-H // TH)                            # masked tail tile if TH does not divide H
    tail_rows = H % TH

    # MXU operand dtype: bf16 models feed the MXU bf16 (f32xf32 is multi-pass emulated on
    # the bf16-native v6e/v7x MXUs, ~3-6x slower); f32 models keep f32 for exactness.
    # Expect ~1e-2 abs differences on ReLU6-bounded activations if bf16 is forced.
    if mxu_dtype is None:
        mxu_dtype = jnp.bfloat16 if x_nchw.dtype == jnp.bfloat16 else jnp.float32

    # Wrapper glue: NCHW (PyTorch contract) <-> NHWC (channels on the lane axis).
    x_nhwc = jnp.transpose(x_nchw, (0, 2, 3, 1))

    # Fold the central-pixel subtraction (per-channel sum of the 3x3 taps) into the
    # center tap so the kernel runs a plain 9-tap accumulate.
    w9c = jnp.transpose(cpdc_weight[:, 0, :, :].reshape(C, 9), (1, 0)).astype(jnp.float32)
    w_eff = w9c.at[4].add(-jnp.sum(w9c, axis=0))                          # (9, C)
    w1_mat = jnp.transpose(conv1_weight[:, :, 0, 0], (1, 0)).astype(mxu_dtype)  # (C, Co)
    b_row = conv1_bias.reshape(1, Co).astype(jnp.float32)

    kernel = _make_edb_kernel(TH, W, C, Co, tail_rows)
    cost = pl.CostEstimate(
        flops=int(N * H * W * C * (18 + 2 * Co + 4)),
        transcendentals=0,
        bytes_accessed=int(N * H * W * (C + Co) * itemsize + (9 * C + C * Co + Co) * 4))

    out_nhwc = pl.pallas_call(
        kernel,
        out_shape=jax.ShapeDtypeStruct((N, H, W, Co), x_nchw.dtype),
        grid=(N, n_h),
        in_specs=[
            # core row block
            pl.BlockSpec((None, TH, W, C), lambda n, h: (n, h, 0, 0)),
            # 1-row halo above (clamped; masked to zero in-kernel at the top border)
            pl.BlockSpec((None, None, W, C),
                         lambda n, h: (n, jnp.maximum(h * TH - 1, 0), 0, 0)),
            # 1-row halo below (clamped; masked to zero in-kernel at the bottom border)
            pl.BlockSpec((None, None, W, C),
                         lambda n, h: (n, jnp.minimum(h * TH + TH, H - 1), 0, 0)),
            pl.BlockSpec((9, C), lambda n, h: (0, 0)),
            pl.BlockSpec((C, Co), lambda n, h: (0, 0)),
            pl.BlockSpec((1, Co), lambda n, h: (0, 0)),
        ],
        out_specs=pl.BlockSpec((None, TH, W, Co), lambda n, h: (n, h, 0, 0)),
        scratch_shapes=[pltpu.VMEM((TH + 2, W, C), jnp.float32)],
        compiler_params=pltpu.CompilerParams(
            dimension_semantics=("parallel", "parallel"),
            vmem_limit_bytes=int(min(max(32 * 1024 * 1024, vmem_cap * 3 // 4),
                                     128 * 1024 * 1024))),
        cost_estimate=cost,
    )(x_nhwc, x_nhwc, x_nhwc, w_eff, w1_mat, b_row)

    return jnp.transpose(out_nhwc, (0, 3, 1, 2))  # back to NCHW


def _reference(x_nchw, cpdc_weight, conv1_weight, conv1_bias):
    """Pure-JAX reference matching the PyTorch EDB_Block.forward."""
    C = x_nchw.shape[1]
    dn = ("NCHW", "OIHW", "NCHW")
    y = lax.conv_general_dilated(x_nchw, cpdc_weight, (1, 1), ((1, 1), (1, 1)),
                                 feature_group_count=C, dimension_numbers=dn)
    wc = jnp.sum(cpdc_weight, axis=(2, 3), keepdims=True)
    yc = lax.conv_general_dilated(x_nchw, wc, (1, 1), ((0, 0), (0, 0)),
                                  feature_group_count=C, dimension_numbers=dn)
    t = jnp.clip(y - yc, 0.0, 6.0)                              # ReLU6
    z = lax.conv_general_dilated(t, conv1_weight, (1, 1), ((0, 0), (0, 0)),
                                 dimension_numbers=dn)
    z = z + conv1_bias[None, :, None, None]
    return z + x_nchw


if __name__ == "__main__":
    key = jax.random.PRNGKey(0)
    kx, kw, k1, kb = jax.random.split(key, 4)

    N, C, H, W = 2, 4, 16, 16
    x = jax.random.normal(kx, (N, C, H, W), dtype=jnp.float32)

    # CPDC_3 weight: kaiming_uniform_(a=sqrt(5)) on (C,1,3,3) -> bound = 1/3.
    cpdc_w = jax.random.uniform(kw, (C, 1, 3, 3), minval=-1.0 / 3.0, maxval=1.0 / 3.0,
                                dtype=jnp.float32)
    # conv1 (1x1, bias=True): bound = 1/sqrt(fan_in) = 1/sqrt(C).
    bnd = 1.0 / (C ** 0.5)
    conv1_w = jax.random.uniform(k1, (C, C, 1, 1), minval=-bnd, maxval=bnd, dtype=jnp.float32)
    conv1_b = jax.random.uniform(kb, (C,), minval=-bnd, maxval=bnd, dtype=jnp.float32)

    ref = jax.block_until_ready(_reference(x, cpdc_w, conv1_w, conv1_b))

    # Default tiling (budget picks TH = H = 16 -> single row tile per batch element).
    out = jax.block_until_ready(edb_block_forward(x, cpdc_w, conv1_w, conv1_b))
    assert out.shape == (N, C, H, W)
    err = float(jnp.max(jnp.abs(out - ref)))
    assert jnp.allclose(out, ref, atol=1e-4, rtol=1e-4), err

    # row_tile=8: two full row tiles -> exercises the halo loads + top/bottom masking.
    out8 = jax.block_until_ready(edb_block_forward(x, cpdc_w, conv1_w, conv1_b, row_tile=8))
    err8 = float(jnp.max(jnp.abs(out8 - ref)))
    assert jnp.allclose(out8, ref, atol=1e-4, rtol=1e-4), err8

    # row_tile=6: 16 = 6 + 6 + 4 -> exercises the masked tail tile + partial writeback.
    out6 = jax.block_until_ready(edb_block_forward(x, cpdc_w, conv1_w, conv1_b, row_tile=6))
    err6 = float(jnp.max(jnp.abs(out6 - ref)))
    assert jnp.allclose(out6, ref, atol=1e-4, rtol=1e-4), err6

    print("KERNEL_OK")
</pallas_src>

<mosaic_0001>
module attributes {stable_mosaic.version = 11 : i64} {
  func.func @kernel(%arg0: i32, %arg1: i32, %arg2: memref<1x16x16x4xf32, #tpu.memory_space<vmem>>, %arg3: memref<1x1x16x4xf32, #tpu.memory_space<vmem>>, %arg4: memref<1x1x16x4xf32, #tpu.memory_space<vmem>>, %arg5: memref<9x4xf32, #tpu.memory_space<vmem>>, %arg6: memref<4x4xf32, #tpu.memory_space<vmem>>, %arg7: memref<1x4xf32, #tpu.memory_space<vmem>>, %arg8: memref<1x16x16x4xf32, #tpu.memory_space<vmem>>, %arg9: memref<18x16x4xf32, #tpu.memory_space<vmem>>) attributes {dimension_semantics = [#tpu.dimension_semantics<parallel>, #tpu.dimension_semantics<parallel>], iteration_bounds = array<i64: 2, 1>, scalar_prefetch = 0 : i64, scratch_operands = 1 : i64, tpu.core_type = #tpu.core_type<tc>, window_params = [{transform_indices = @transform_0, window_bounds = array<i64: 1, 16, 16, 4>}, {transform_indices = @transform_1, window_bounds = array<i64: 1, 1, 16, 4>}, {transform_indices = @transform_2, window_bounds = array<i64: 1, 1, 16, 4>}, {pipeline_mode = #tpu.pipeline_mode<synchronous>, transform_indices = @transform_3, window_bounds = array<i64: 9, 4>}, {pipeline_mode = #tpu.pipeline_mode<synchronous>, transform_indices = @transform_4, window_bounds = array<i64: 4, 4>}, {pipeline_mode = #tpu.pipeline_mode<synchronous>, transform_indices = @transform_5, window_bounds = array<i64: 1, 4>}, {transform_indices = @transform_6, window_bounds = array<i64: 1, 16, 16, 4>}]} {
    %c0 = arith.constant 0 : index
    %c0_0 = arith.constant 0 : index
    %c0_1 = arith.constant 0 : index
    %c0_2 = arith.constant 0 : index
    %0 = vector.load %arg2[%c0, %c0_0, %c0_1, %c0_2] : memref<1x16x16x4xf32, #tpu.memory_space<vmem>>, vector<1x16x16x4xf32>
    %1 = vector.shape_cast %0 : vector<1x16x16x4xf32> to vector<16x16x4xf32>
    %c1 = arith.constant 1 : index
    %c0_3 = arith.constant 0 : index
    %c0_4 = arith.constant 0 : index
    %2 = vector.load %arg9[%c1, %c0_3, %c0_4] : memref<18x16x4xf32, #tpu.memory_space<vmem>>, vector<16x16x4xf32>
    tpu.vector_store %arg9[%c1, %c0_3, %c0_4], %1 {strides = array<i32>} : memref<18x16x4xf32, #tpu.memory_space<vmem>>, vector<16x16x4xf32>,
    %c0_i32 = arith.constant 0 : i32
    %3 = arith.cmpi sgt, %arg1, %c0_i32 : i32
    %4 = arith.extui %3 : i1 to i32
    %5 = arith.sitofp %4 : i32 to f32
    %c0_5 = arith.constant 0 : index
    %c0_6 = arith.constant 0 : index
    %c0_7 = arith.constant 0 : index
    %c0_8 = arith.constant 0 : index
    %6 = vector.load %arg3[%c0_5, %c0_6, %c0_7, %c0_8] : memref<1x1x16x4xf32, #tpu.memory_space<vmem>>, vector<1x1x16x4xf32>
    %7 = vector.shape_cast %6 : vector<1x1x16x4xf32> to vector<16x4xf32>
    %8 = vector.broadcast %5 : f32 to vector<16x4xf32>
    %9 = arith.mulf %7, %8 : vector<16x4xf32>
    %c0_9 = arith.constant 0 : index
    %c0_10 = arith.constant 0 : index
    %c0_11 = arith.constant 0 : index
    %10 = vector.load %arg9[%c0_9, %c0_10, %c0_11] : memref<18x16x4xf32, #tpu.memory_space<vmem>>, vector<1x16x4xf32>
    %11 = vector.shape_cast %10 : vector<1x16x4xf32> to vector<16x4xf32>
    %12 = vector.shape_cast %9 : vector<16x4xf32> to vector<1x16x4xf32>
    tpu.vector_store %arg9[%c0_9, %c0_10, %c0_11], %12 {strides = array<i32>} : memref<18x16x4xf32, #tpu.memory_space<vmem>>, vector<1x16x4xf32>,
    %c0_i32_12 = arith.constant 0 : i32
    %13 = arith.cmpi slt, %arg1, %c0_i32_12 : i32
    %14 = arith.extui %13 : i1 to i32
    %15 = arith.sitofp %14 : i32 to f32
    %c0_13 = arith.constant 0 : index
    %c0_14 = arith.constant 0 : index
    %c0_15 = arith.constant 0 : index
    %c0_16 = arith.constant 0 : index
    %16 = vector.load %arg4[%c0_13, %c0_14, %c0_15, %c0_16] : memref<1x1x16x4xf32, #tpu.memory_space<vmem>>, vector<1x1x16x4xf32>
    %17 = vector.shape_cast %16 : vector<1x1x16x4xf32> to vector<16x4xf32>
    %18 = vector.broadcast %15 : f32 to vector<16x4xf32>
    %19 = arith.mulf %17, %18 : vector<16x4xf32>
    %c17 = arith.constant 17 : index
    %c0_17 = arith.constant 0 : index
    %c0_18 = arith.constant 0 : index
    %20 = vector.load %arg9[%c17, %c0_17, %c0_18] : memref<18x16x4xf32, #tpu.memory_space<vmem>>, vector<1x16x4xf32>
    %21 = vector.shape_cast %20 : vector<1x16x4xf32> to vector<16x4xf32>
    %22 = vector.shape_cast %19 : vector<16x4xf32> to vector<1x16x4xf32>
    tpu.vector_store %arg9[%c17, %c0_17, %c0_18], %22 {strides = array<i32>} : memref<18x16x4xf32, #tpu.memory_space<vmem>>, vector<1x16x4xf32>,
    %c0_19 = arith.constant 0 : index
    %c0_20 = arith.constant 0 : index
    %c0_21 = arith.constant 0 : index
    %23 = vector.load %arg9[%c0_19, %c0_20, %c0_21] : memref<18x16x4xf32, #tpu.memory_space<vmem>>, vector<18x16x4xf32>
    %24 = tpu.iota {dimensions = array<i32: 1>} : vector<1x16x4xi32>
    %c0_i32_22 = arith.constant 0 : i32
    %25 = vector.broadcast %c0_i32_22 : i32 to vector<1x16x4xi32>
    %26 = arith.cmpi sgt, %24, %25 : vector<1x16x4xi32>
    %c1_i32 = arith.constant 1 : i32
    %27 = tpu.dynamic_rotate %23 by %c1_i32 dim 1 : vector<18x16x4xf32>, i32 -> vector<18x16x4xf32>
    %cst = arith.constant 0.000000e+00 : f32
    %28 = vector.shape_cast %26 : vector<1x16x4xi1> to vector<1x16x4xi1>
    %29 = vector.broadcast %28 : vector<1x16x4xi1> to vector<18x16x4xi1>
    %30 = vector.broadcast %cst : f32 to vector<18x16x4xf32>
    %31 = arith.select %29, %27, %30 : vector<18x16x4xi1>, vector<18x16x4xf32>
    %c15_i32 = arith.constant 15 : i32
    %32 = vector.broadcast %c15_i32 : i32 to vector<1x16x4xi32>
    %33 = arith.cmpi slt, %24, %32 : vector<1x16x4xi32>
    %c15_i32_23 = arith.constant 15 : i32
    %34 = tpu.dynamic_rotate %23 by %c15_i32_23 dim 1 : vector<18x16x4xf32>, i32 -> vector<18x16x4xf32>
    %cst_24 = arith.constant 0.000000e+00 : f32
    %35 = vector.shape_cast %33 : vector<1x16x4xi1> to vector<1x16x4xi1>
    %36 = vector.broadcast %35 : vector<1x16x4xi1> to vector<18x16x4xi1>
    %37 = vector.broadcast %cst_24 : f32 to vector<18x16x4xf32>
    %38 = arith.select %36, %34, %37 : vector<18x16x4xi1>, vector<18x16x4xf32>
    %c0_25 = arith.constant 0 : index
    %c0_26 = arith.constant 0 : index
    %39 = vector.load %arg5[%c0_25, %c0_26] : memref<9x4xf32, #tpu.memory_space<vmem>>, vector<9x4xf32>
    %40 = vector.extract_strided_slice %31 {offsets = [0, 0, 0], sizes = [16, 16, 4], strides = [1, 1, 1]} : vector<18x16x4xf32> to vector<16x16x4xf32>
    %41 = vector.extract_strided_slice %39 {offsets = [0, 0], sizes = [1, 4], strides = [1, 1]} : vector<9x4xf32> to vector<1x4xf32>
    %42 = vector.shape_cast %41 : vector<1x4xf32> to vector<4xf32>
    %43 = vector.shape_cast %42 : vector<4xf32> to vector<1x1x4xf32>
    %44 = vector.broadcast %43 : vector<1x1x4xf32> to vector<16x16x4xf32>
    %45 = arith.mulf %40, %44 : vector<16x16x4xf32>
    %46 = vector.extract_strided_slice %23 {offsets = [0, 0, 0], sizes = [16, 16, 4], strides = [1, 1, 1]} : vector<18x16x4xf32> to vector<16x16x4xf32>
    %47 = vector.extract_strided_slice %39 {offsets = [1, 0], sizes = [1, 4], strides = [1, 1]} : vector<9x4xf32> to vector<1x4xf32>
    %48 = vector.shape_cast %47 : vector<1x4xf32> to vector<4xf32>
    %49 = vector.shape_cast %48 : vector<4xf32> to vector<1x1x4xf32>
    %50 = vector.broadcast %49 : vector<1x1x4xf32> to vector<16x16x4xf32>
    %51 = arith.mulf %46, %50 : vector<16x16x4xf32>
    %52 = arith.addf %45, %51 : vector<16x16x4xf32>
    %53 = vector.extract_strided_slice %38 {offsets = [0, 0, 0], sizes = [16, 16, 4], strides = [1, 1, 1]} : vector<18x16x4xf32> to vector<16x16x4xf32>
    %54 = vector.extract_strided_slice %39 {offsets = [2, 0], sizes = [1, 4], strides = [1, 1]} : vector<9x4xf32> to vector<1x4xf32>
    %55 = vector.shape_cast %54 : vector<1x4xf32> to vector<4xf32>
    %56 = vector.shape_cast %55 : vector<4xf32> to vector<1x1x4xf32>
    %57 = vector.broadcast %56 : vector<1x1x4xf32> to vector<16x16x4xf32>
    %58 = arith.mulf %53, %57 : vector<16x16x4xf32>
    %59 = arith.addf %52, %58 : vector<16x16x4xf32>
    %60 = vector.extract_strided_slice %31 {offsets = [1, 0, 0], sizes = [16, 16, 4], strides = [1, 1, 1]} : vector<18x16x4xf32> to vector<16x16x4xf32>
    %61 = vector.extract_strided_slice %39 {offsets = [3, 0], sizes = [1, 4], strides = [1, 1]} : vector<9x4xf32> to vector<1x4xf32>
    %62 = vector.shape_cast %61 : vector<1x4xf32> to vector<4xf32>
    %63 = vector.shape_cast %62 : vector<4xf32> to vector<1x1x4xf32>
    %64 = vector.broadcast %63 : vector<1x1x4xf32> to vector<16x16x4xf32>
    %65 = arith.mulf %60, %64 : vector<16x16x4xf32>
    %66 = arith.addf %59, %65 : vector<16x16x4xf32>
    %67 = vector.extract_strided_slice %23 {offsets = [1, 0, 0], sizes = [16, 16, 4], strides = [1, 1, 1]} : vector<18x16x4xf32> to vector<16x16x4xf32>
    %68 = vector.extract_strided_slice %39 {offsets = [4, 0], sizes = [1, 4], strides = [1, 1]} : vector<9x4xf32> to vector<1x4xf32>
    %69 = vector.shape_cast %68 : vector<1x4xf32> to vector<4xf32>
    %70 = vector.shape_cast %69 : vector<4xf32> to vector<1x1x4xf32>
    %71 = vector.broadcast %70 : vector<1x1x4xf32> to vector<16x16x4xf32>
    %72 = arith.mulf %67, %71 : vector<16x16x4xf32>
    %73 = arith.addf %66, %72 : vector<16x16x4xf32>
    %74 = vector.extract_strided_slice %38 {offsets = [1, 0, 0], sizes = [16, 16, 4], strides = [1, 1, 1]} : vector<18x16x4xf32> to vector<16x16x4xf32>
    %75 = vector.extract_strided_slice %39 {offsets = [5, 0], sizes = [1, 4], strides = [1, 1]} : vector<9x4xf32> to vector<1x4xf32>
    %76 = vector.shape_cast %75 : vector<1x4xf32> to vector<4xf32>
    %77 = vector.shape_cast %76 : vector<4xf32> to vector<1x1x4xf32>
    %78 = vector.broadcast %77 : vector<1x1x4xf32> to vector<16x16x4xf32>
    %79 = arith.mulf %74, %78 : vector<16x16x4xf32>
    %80 = arith.addf %73, %79 : vector<16x16x4xf32>
    %81 = vector.extract_strided_slice %31 {offsets = [2, 0, 0], sizes = [16, 16, 4], strides = [1, 1, 1]} : vector<18x16x4xf32> to vector<16x16x4xf32>
    %82 = vector.extract_strided_slice %39 {offsets = [6, 0], sizes = [1, 4], strides = [1, 1]} : vector<9x4xf32> to vector<1x4xf32>
    %83 = vector.shape_cast %82 : vector<1x4xf32> to vector<4xf32>
    %84 = vector.shape_cast %83 : vector<4xf32> to vector<1x1x4xf32>
    %85 = vector.broadcast %84 : vector<1x1x4xf32> to vector<16x16x4xf32>
    %86 = arith.mulf %81, %85 : vector<16x16x4xf32>
    %87 = arith.addf %80, %86 : vector<16x16x4xf32>
    %88 = vector.extract_strided_slice %23 {offsets = [2, 0, 0], sizes = [16, 16, 4], strides = [1, 1, 1]} : vector<18x16x4xf32> to vector<16x16x4xf32>
    %89 = vector.extract_strided_slice %39 {offsets = [7, 0], sizes = [1, 4], strides = [1, 1]} : vector<9x4xf32> to vector<1x4xf32>
    %90 = vector.shape_cast %89 : vector<1x4xf32> to vector<4xf32>
    %91 = vector.shape_cast %90 : vector<4xf32> to vector<1x1x4xf32>
    %92 = vector.broadcast %91 : vector<1x1x4xf32> to vector<16x16x4xf32>
    %93 = arith.mulf %88, %92 : vector<16x16x4xf32>
    %94 = arith.addf %87, %93 : vector<16x16x4xf32>
    %95 = vector.extract_strided_slice %38 {offsets = [2, 0, 0], sizes = [16, 16, 4], strides = [1, 1, 1]} : vector<18x16x4xf32> to vector<16x16x4xf32>
    %96 = vector.extract_strided_slice %39 {offsets = [8, 0], sizes = [1, 4], strides = [1, 1]} : vector<9x4xf32> to vector<1x4xf32>
    %97 = vector.shape_cast %96 : vector<1x4xf32> to vector<4xf32>
    %98 = vector.shape_cast %97 : vector<4xf32> to vector<1x1x4xf32>
    %99 = vector.broadcast %98 : vector<1x1x4xf32> to vector<16x16x4xf32>
    %100 = arith.mulf %95, %99 : vector<16x16x4xf32>
    %101 = arith.addf %94, %100 : vector<16x16x4xf32>
    %cst_27 = arith.constant 0.000000e+00 : f32
    %cst_28 = arith.constant 6.000000e+00 : f32
    %102 = vector.broadcast %cst_27 : f32 to vector<16x16x4xf32>
    %103 = arith.maximumf %102, %101 : vector<16x16x4xf32>
    %104 = vector.broadcast %cst_28 : f32 to vector<16x16x4xf32>
    %105 = arith.minimumf %104, %103 : vector<16x16x4xf32>
    %106 = vector.shape_cast %105 : vector<16x16x4xf32> to vector<256x4xf32>
    %c0_29 = arith.constant 0 : index
    %c0_30 = arith.constant 0 : index
    %107 = vector.load %arg6[%c0_29, %c0_30] : memref<4x4xf32, #tpu.memory_space<vmem>>, vector<4x4xf32>
    %cst_31 = arith.constant dense<0.000000e+00> : vector<256x4xf32>
    %108 = tpu.matmul %106, %107, %cst_31 {dimension_numbers = #tpu.dot_dimension_numbers<[1], [0], [0], [1], [0, 0, 1, 1], [], []>} : vector<256x4xf32>, vector<4x4xf32>, vector<256x4xf32> -> vector<256x4xf32>
    %c0_32 = arith.constant 0 : index
    %c0_33 = arith.constant 0 : index
    %109 = vector.load %arg7[%c0_32, %c0_33] : memref<1x4xf32, #tpu.memory_space<vmem>>, vector<1x4xf32>
    %110 = vector.broadcast %109 : vector<1x4xf32> to vector<256x4xf32>
    %111 = arith.addf %108, %110 : vector<256x4xf32>
    %112 = vector.shape_cast %111 : vector<256x4xf32> to vector<16x16x4xf32>
    %113 = arith.addf %112, %1 : vector<16x16x4xf32>
    %c0_34 = arith.constant 0 : index
    %c0_35 = arith.constant 0 : index
    %c0_36 = arith.constant 0 : index
    %c0_37 = arith.constant 0 : index
    %114 = vector.load %arg8[%c0_34, %c0_35, %c0_36, %c0_37] : memref<1x16x16x4xf32, #tpu.memory_space<vmem>>, vector<1x16x16x4xf32>
    %115 = vector.shape_cast %114 : vector<1x16x16x4xf32> to vector<16x16x4xf32>
    %116 = vector.shape_cast %113 : vector<16x16x4xf32> to vector<1x16x16x4xf32>
    tpu.vector_store %arg8[%c0_34, %c0_35, %c0_36, %c0_37], %116 {strides = array<i32>} : memref<1x16x16x4xf32, #tpu.memory_space<vmem>>, vector<1x16x16x4xf32>,
    return
  }
  func.func @transform_0(%arg0: i32, %arg1: i32) -> (i32, i32, i32, i32) {
    %c0_i32 = arith.constant 0 : i32
    %c0_i32_0 = arith.constant 0 : i32
    %c0_i32_1 = arith.constant 0 : i32
    return %arg0, %arg1, %c0_i32, %c0_i32_0 : i32, i32, i32, i32
  }
  func.func @transform_1(%arg0: i32, %arg1: i32) -> (i32, i32, i32, i32) {
    %c16_i32 = arith.constant 16 : i32
    %0 = arith.muli %arg1, %c16_i32 : i32
    %c1_i32 = arith.constant 1 : i32
    %1 = arith.subi %0, %c1_i32 : i32
    %c0_i32 = arith.constant 0 : i32
    %2 = arith.maxsi %1, %c0_i32 : i32
    %c0_i32_0 = arith.constant 0 : i32
    %c0_i32_1 = arith.constant 0 : i32
    %c0_i32_2 = arith.constant 0 : i32
    return %arg0, %2, %c0_i32_0, %c0_i32_1 : i32, i32, i32, i32
  }
  func.func @transform_2(%arg0: i32, %arg1: i32) -> (i32, i32, i32, i32) {
    %c16_i32 = arith.constant 16 : i32
    %0 = arith.muli %arg1, %c16_i32 : i32
    %c16_i32_0 = arith.constant 16 : i32
    %1 = arith.addi %0, %c16_i32_0 : i32
    %c15_i32 = arith.constant 15 : i32
    %2 = arith.minsi %1, %c15_i32 : i32
    %c0_i32 = arith.constant 0 : i32
    %c0_i32_1 = arith.constant 0 : i32
    %c0_i32_2 = arith.constant 0 : i32
    return %arg0, %2, %c0_i32, %c0_i32_1 : i32, i32, i32, i32
  }
  func.func @transform_3(%arg0: i32, %arg1: i32) -> (i32, i32) {
    %c0_i32 = arith.constant 0 : i32
    %c0_i32_0 = arith.constant 0 : i32
    %c0_i32_1 = arith.constant 0 : i32
    return %c0_i32, %c0_i32_0 : i32, i32
  }
  func.func @transform_4(%arg0: i32, %arg1: i32) -> (i32, i32) {
    %c0_i32 = arith.constant 0 : i32
    %c0_i32_0 = arith.constant 0 : i32
    %c0_i32_1 = arith.constant 0 : i32
    return %c0_i32, %c0_i32_0 : i32, i32
  }
  func.func @transform_5(%arg0: i32, %arg1: i32) -> (i32, i32) {
    %c0_i32 = arith.constant 0 : i32
    %c0_i32_0 = arith.constant 0 : i32
    %c0_i32_1 = arith.constant 0 : i32
    return %c0_i32, %c0_i32_0 : i32, i32
  }
  func.func @transform_6(%arg0: i32, %arg1: i32) -> (i32, i32, i32, i32) {
    %c0_i32 = arith.constant 0 : i32
    %c0_i32_0 = arith.constant 0 : i32
    %c0_i32_1 = arith.constant 0 : i32
    return %arg0, %arg1, %c0_i32, %c0_i32_0 : i32, i32, i32, i32
  }
}

</mosaic_0001>

<llo_original>
// kernel: tpu_custom_call.1
$region0: #{tpu_custom_call.1}
  #allocation0 [shape = 'u32[]', space=smem, size = 0x4, offset = 0x4, fixed_abs, tag = 'smem constant byte address 0x4 - core index']
  #allocation1 [shape = 'u32[144,128]{1,0:T(1,128)}', space=vmem, size = 0x12000, scoped, tag = 'internal scratch']
  #allocation2 [shape = 'f32[18,16,4]{2,1,0:T(8,128)}', space=vmem, size = 0x24000, scoped, tag = 'scratch operand']
  %s0 = inlined_call_operand.vmem [shape: f32[2,16,16,4], index: 0, kind: input, shape index: {}]
  %s1 = inlined_call_operand.vmem [shape: f32[2,16,16,4], index: 1, kind: input, shape index: {}]
  %s2 = inlined_call_operand.vmem [shape: f32[2,16,16,4], index: 2, kind: input, shape index: {}]
  %s3 = inlined_call_operand.vmem [shape: f32[9,4], index: 3, kind: input, shape index: {}]
  %s4 = inlined_call_operand.vmem [shape: f32[4,4], index: 4, kind: input, shape index: {}]
  %s5 = inlined_call_operand.vmem [shape: f32[1,4], index: 5, kind: input, shape index: {}]
  %s6 = inlined_call_operand.vmem [shape: f32[2,16,16,4], index: 6, kind: output, shape index: {}]
  %s7 = sld [smem:[#allocation0]]
  $region57: #{tpu_custom_call.1} parent=0
    _
  %s9 = ssub.s32 1, %s7
  %s10 = scalar_select 0, %s9, %s7
  loop: start=0, step=1, limit=4
  $region2: #{tpu_custom_call.1} parent=0 // loop_pre_header
    _
  $region3: #{tpu_custom_call.1} parent=0 // loop_header
    %s12 = sphi 0, %s16
    %p13 = scmp.ge.s32.totalorder %s12, 4
    %s19 = sphi 0, %s31
    %s20 = sphi 0, %s27
    %s21 = sphi 0, %s19
    %s22 = sphi 0, %s20
    %s23 = sphi 0, %s21
    %s24 = sphi 0, %s22
    %s36 = sphi 0, %s38
    %s39 = sphi 0, %s36
    %s40 = sphi 0, %s39
    %s56 = sphi 0, %s40
    %s72 = sphi 0, %s74
    %s75 = sphi 0, %s72
    %s76 = sphi 0, %s75
    %s92 = sphi 0, %s76
    %s108 = sphi 0, %s110
    %s111 = sphi 0, %s108
    %s112 = sphi 0, %s111
    %s128 = sphi 0, %s112
    %s132 = sphi 0, %s132
    %s134 = sphi 0, %s132
    %s135 = sphi 0, %s134
    %s149 = sphi 0, %s135
    %s153 = sphi 0, %s153
    %s155 = sphi 0, %s153
    %s156 = sphi 0, %s155
    %s170 = sphi 0, %s156
    %s174 = sphi 0, %s174
    %s176 = sphi 0, %s174
    %s177 = sphi 0, %s176
    %s191 = sphi 0, %s177
    %s199 = sphi 0, %s201
    %s202 = sphi 0, %s199
    %s203 = sphi 0, %s202
    %s219 = sphi 0, %s203
  $region4: #{tpu_custom_call.1} parent=0 // loop_header_branch
    %15 = sbr.rel (%p13) target = $region8
  $region5: #{tpu_custom_call.1} parent=0 // loop_body
    %s17 = ssub.s32 %s12, 1
    %s18 = ssub.s32 %s12, 2
    %s25 = sadd.s32 1, %s20
    %p26 = scmp.ge.s32.totalorder %s25, 1
    %s27 = scalar_select %p26, 0, %s25
    %s28 = sadd.s32 1, %s19
    %s29 = scalar_select %p26, %s28, %s19
    %p30 = scmp.ge.s32.totalorder %s29, 2
    %s31 = scalar_select %p30, 0, %s29
    %s32 = ssub.s32 %s19, %s31
    %s33 = ssub.s32 %s20, %s27
    %s34 = sor.u32 %s32, %s33
    %p35 = scmp.eq.s32.totalorder %s34, 0
    %s37 = sadd.s32 %s36, 1
    %s38 = scalar_select %p35, %s36, %s37
    %p41 = pneg %p35
    %p42 = scmp.eq.s32.totalorder %s12, 1
    %p43 = por %p41, %p42
    %p44 = scmp.ne.s32.totalorder %s36, %s39
    %p45 = scmp.eq.s32.totalorder %s12, 0
    %p46 = por %p44, %p45
    %p47 = scmp.ne.s32.totalorder %s36, %s39
    %p48 = scmp.eq.s32.totalorder %s17, 1
    %p49 = por %p47, %p48
    %p50 = scmp.ne.s32.totalorder %s39, %s40
    %p51 = scmp.eq.s32.totalorder %s17, 0
    %p52 = por %p50, %p51
    %p53 = scmp.ne.s32.totalorder %s39, %s40
    %p54 = scmp.eq.s32.totalorder %s18, 1
    %p55 = por %p53, %p54
    %p57 = scmp.ne.s32.totalorder %s40, %s56
    %p58 = scmp.eq.s32.totalorder %s18, 0
    %p59 = por %p57, %p58
    %s60 = smul.u32 %s20, 16
    %s61 = ssub.s32 %s60, 1
    %p62 = scmp.gt.s32.totalorder %s61, 0
    %s63 = scalar_select %p62, %s61, 0
    %s64 = smul.u32 %s27, 16
    %s65 = ssub.s32 %s64, 1
    %p66 = scmp.gt.s32.totalorder %s65, 0
    %s67 = scalar_select %p66, %s65, 0
    %s68 = ssub.s32 %s19, %s31
    %s69 = ssub.s32 %s63, %s67
    %s70 = sor.u32 %s68, %s69
    %p71 = scmp.eq.s32.totalorder %s70, 0
    %s73 = sadd.s32 %s72, 1
    %s74 = scalar_select %p71, %s72, %s73
    %p77 = pneg %p71
    %p78 = scmp.eq.s32.totalorder %s12, 1
    %p79 = por %p77, %p78
    %p80 = scmp.ne.s32.totalorder %s72, %s75
    %p81 = scmp.eq.s32.totalorder %s12, 0
    %p82 = por %p80, %p81
    %p83 = scmp.ne.s32.totalorder %s72, %s75
    %p84 = scmp.eq.s32.totalorder %s17, 1
    %p85 = por %p83, %p84
    %p86 = scmp.ne.s32.totalorder %s75, %s76
    %p87 = scmp.eq.s32.totalorder %s17, 0
    %p88 = por %p86, %p87
    %p89 = scmp.ne.s32.totalorder %s75, %s76
    %p90 = scmp.eq.s32.totalorder %s18, 1
    %p91 = por %p89, %p90
    %p93 = scmp.ne.s32.totalorder %s76, %s92
    %p94 = scmp.eq.s32.totalorder %s18, 0
    %p95 = por %p93, %p94
    %s96 = smul.u32 %s20, 16
    %s97 = sadd.s32 %s96, 16
    %p98 = scmp.lt.s32.totalorder %s97, 15
    %s99 = scalar_select %p98, %s97, 15
    %s100 = smul.u32 %s27, 16
    %s101 = sadd.s32 %s100, 16
    %p102 = scmp.lt.s32.totalorder %s101, 15
    %s103 = scalar_select %p102, %s101, 15
    %s104 = ssub.s32 %s19, %s31
    %s105 = ssub.s32 %s99, %s103
    %s106 = sor.u32 %s104, %s105
    %p107 = scmp.eq.s32.totalorder %s106, 0
    %s109 = sadd.s32 %s108, 1
    %s110 = scalar_select %p107, %s108, %s109
    %p113 = pneg %p107
    %p114 = scmp.eq.s32.totalorder %s12, 1
    %p115 = por %p113, %p114
    %p116 = scmp.ne.s32.totalorder %s108, %s111
    %p117 = scmp.eq.s32.totalorder %s12, 0
    %p118 = por %p116, %p117
    %p119 = scmp.ne.s32.totalorder %s108, %s111
    %p120 = scmp.eq.s32.totalorder %s17, 1
    %p121 = por %p119, %p120
    %p122 = scmp.ne.s32.totalorder %s111, %s112
    %p123 = scmp.eq.s32.totalorder %s17, 0
    %p124 = por %p122, %p123
    %p125 = scmp.ne.s32.totalorder %s111, %s112
    %p126 = scmp.eq.s32.totalorder %s18, 1
    %p127 = por %p125, %p126
    %p129 = scmp.ne.s32.totalorder %s112, %s128
    %p130 = scmp.eq.s32.totalorder %s18, 0
    %p131 = por %p129, %p130
    %s133 = sadd.s32 %s132, 1
    %p136 = scmp.eq.s32.totalorder %s12, 1
    %p137 = scmp.ne.s32.totalorder %s132, %s134
    %p138 = scmp.eq.s32.totalorder %s12, 0
    %p139 = por %p137, %p138
    %p140 = scmp.ne.s32.totalorder %s132, %s134
    %p141 = scmp.eq.s32.totalorder %s17, 1
    %p142 = por %p140, %p141
    %p143 = scmp.ne.s32.totalorder %s134, %s135
    %p144 = scmp.eq.s32.totalorder %s17, 0
    %p145 = por %p143, %p144
    %p146 = scmp.ne.s32.totalorder %s134, %s135
    %p147 = scmp.eq.s32.totalorder %s18, 1
    %p148 = por %p146, %p147
    %p150 = scmp.ne.s32.totalorder %s135, %s149
    %p151 = scmp.eq.s32.totalorder %s18, 0
    %p152 = por %p150, %p151
    %s154 = sadd.s32 %s153, 1
    %p157 = scmp.eq.s32.totalorder %s12, 1
    %p158 = scmp.ne.s32.totalorder %s153, %s155
    %p159 = scmp.eq.s32.totalorder %s12, 0
    %p160 = por %p158, %p159
    %p161 = scmp.ne.s32.totalorder %s153, %s155
    %p162 = scmp.eq.s32.totalorder %s17, 1
    %p163 = por %p161, %p162
    %p164 = scmp.ne.s32.totalorder %s155, %s156
    %p165 = scmp.eq.s32.totalorder %s17, 0
    %p166 = por %p164, %p165
    %p167 = scmp.ne.s32.totalorder %s155, %s156
    %p168 = scmp.eq.s32.totalorder %s18, 1
    %p169 = por %p167, %p168
    %p171 = scmp.ne.s32.totalorder %s156, %s170
    %p172 = scmp.eq.s32.totalorder %s18, 0
    %p173 = por %p171, %p172
    %s175 = sadd.s32 %s174, 1
    %p178 = scmp.eq.s32.totalorder %s12, 1
    %p179 = scmp.ne.s32.totalorder %s174, %s176
    %p180 = scmp.eq.s32.totalorder %s12, 0
    %p181 = por %p179, %p180
    %p182 = scmp.ne.s32.totalorder %s174, %s176
    %p183 = scmp.eq.s32.totalorder %s17, 1
    %p184 = por %p182, %p183
    %p185 = scmp.ne.s32.totalorder %s176, %s177
    %p186 = scmp.eq.s32.totalorder %s17, 0
    %p187 = por %p185, %p186
    %p188 = scmp.ne.s32.totalorder %s176, %s177
    %p189 = scmp.eq.s32.totalorder %s18, 1
    %p190 = por %p188, %p189
    %p192 = scmp.ne.s32.totalorder %s177, %s191
    %p193 = scmp.eq.s32.totalorder %s18, 0
    %p194 = por %p192, %p193
    %s195 = ssub.s32 %s19, %s31
    %s196 = ssub.s32 %s20, %s27
    %s197 = sor.u32 %s195, %s196
    %p198 = scmp.eq.s32.totalorder %s197, 0
    %s200 = sadd.s32 %s199, 1
    %s201 = scalar_select %p198, %s199, %s200
    %p204 = pneg %p198
    %p205 = scmp.eq.s32.totalorder %s12, 1
    %p206 = por %p204, %p205
    %p207 = scmp.ne.s32.totalorder %s199, %s202
    %p208 = scmp.eq.s32.totalorder %s12, 0
    %p209 = por %p207, %p208
    %p210 = scmp.ne.s32.totalorder %s199, %s202
    %p211 = scmp.eq.s32.totalorder %s17, 1
    %p212 = por %p210, %p211
    %p213 = scmp.ne.s32.totalorder %s202, %s203
    %p214 = scmp.eq.s32.totalorder %s17, 0
    %p215 = por %p213, %p214
    %p216 = scmp.ne.s32.totalorder %s202, %s203
    %p217 = scmp.eq.s32.totalorder %s18, 1
    %p218 = por %p216, %p217
    %p220 = scmp.ne.s32.totalorder %s203, %s219
    %p221 = scmp.eq.s32.totalorder %s18, 0
    %p222 = por %p220, %p221
    %p223 = scmp.le.s32.totalorder 1, %s12
    %p224 = scmp.lt.s32.totalorder %s12, 3
    %p225 = pnand %p223, %p224
    %p226 = pneg %p225
    // Predicated region
    $region9: #{tpu_custom_call.1} parent=5 // pred_check
      _
    $region10: #{tpu_custom_call.1} parent=5 // pred_check_branch
      %228 = sbr.rel (%p225) target = $region12
    $region11: #{tpu_custom_call.1} parent=5 // pred_region
      %s229 = ssub.s32 %s12, 1
      // Predicated region
      $region13: #{tpu_custom_call.1} parent=11 // pred_check
        %p230 = pneg %p145
      $region14: #{tpu_custom_call.1} parent=11 // pred_check_branch
        %232 = sbr.rel (%p230) target = $region16
      $region15: #{tpu_custom_call.1} parent=11 // pred_region
        _
      $region16: #{tpu_custom_call.1} parent=11 // pred_fallthru
        _
      // Predicated region
      $region17: #{tpu_custom_call.1} parent=11 // pred_check
        %p233 = pneg %p166
      $region18: #{tpu_custom_call.1} parent=11 // pred_check_branch
        %235 = sbr.rel (%p233) target = $region20
      $region19: #{tpu_custom_call.1} parent=11 // pred_region
        _
      $region20: #{tpu_custom_call.1} parent=11 // pred_fallthru
        _
      // Predicated region
      $region21: #{tpu_custom_call.1} parent=11 // pred_check
        %p236 = pneg %p187
      $region22: #{tpu_custom_call.1} parent=11 // pred_check_branch
        %238 = sbr.rel (%p236) target = $region24
      $region23: #{tpu_custom_call.1} parent=11 // pred_region
        _
      $region24: #{tpu_custom_call.1} parent=11 // pred_fallthru
        _
    $region12: #{tpu_custom_call.1} parent=5 // pred_fallthru
      _
    %p239 = scmp.lt.s32.totalorder %s12, 2
    // Predicated region
    $region25: #{tpu_custom_call.1} parent=5 // pred_check
      %p240 = pneg %p239
    $region26: #{tpu_custom_call.1} parent=5 // pred_check_branch
      %242 = sbr.rel (%p240) target = $region28
    $region27: #{tpu_custom_call.1} parent=5 // pred_region
      // Predicated region
      $region29: #{tpu_custom_call.1} parent=27 // pred_check
        %p243 = pneg %p46
      $region30: #{tpu_custom_call.1} parent=27 // pred_check_branch
        %245 = sbr.rel (%p243) target = $region32
      $region31: #{tpu_custom_call.1} parent=27 // pred_region
        %s246 = smul.u32 16, %s20
        %p247 = scmp.lt.s32.totalorder %s19, 1
        %s248 = scalar_select %p247, %s19, 1
        %p249 = scmp.lt.s32.totalorder %s246, 15
        %s250 = scalar_select %p249, %s246, 15
        %s251 = smul.addr %s250, 2
        %s252 = smul.addr %s248, 32
        %s253 = sadd.s32 %s251, %s252
        %s254 = smul.addr %s253, 8
        %s255 = scalar_lea.vmem %s0, %s254
        %s256 = smul.u32 16, %s20
      $region32: #{tpu_custom_call.1} parent=27 // pred_fallthru
        _
      // Predicated region
      $region33: #{tpu_custom_call.1} parent=27 // pred_check
        %p257 = pneg %p82
      $region34: #{tpu_custom_call.1} parent=27 // pred_check_branch
        %259 = sbr.rel (%p257) target = $region36
      $region35: #{tpu_custom_call.1} parent=27 // pred_region
        %s260 = smul.u32 %s20, 16
        %s261 = ssub.s32 %s260, 1
        %p262 = scmp.gt.s32.totalorder %s261, 0
        %s263 = scalar_select %p262, %s261, 0
        %p264 = scmp.lt.s32.totalorder %s19, 1
        %s265 = scalar_select %p264, %s19, 1
        %p266 = scmp.lt.s32.totalorder %s263, 15
        %s267 = scalar_select %p266, %s263, 15
        %s268 = smul.addr %s267, 2
        %s269 = smul.addr %s265, 32
        %s270 = sadd.s32 %s268, %s269
        %s271 = smul.addr %s270, 8
        %s272 = scalar_lea.vmem %s1, %s271
        %s273 = smul.u32 %s20, 16
        %s274 = ssub.s32 %s273, 1
        %p275 = scmp.gt.s32.totalorder %s274, 0
        %s276 = scalar_select %p275, %s274, 0
      $region36: #{tpu_custom_call.1} parent=27 // pred_fallthru
        _
      // Predicated region
      $region37: #{tpu_custom_call.1} parent=27 // pred_check
        %p277 = pneg %p118
      $region38: #{tpu_custom_call.1} parent=27 // pred_check_branch
        %279 = sbr.rel (%p277) target = $region40
      $region39: #{tpu_custom_call.1} parent=27 // pred_region
        %s280 = smul.u32 %s20, 16
        %s281 = sadd.s32 %s280, 16
        %p282 = scmp.lt.s32.totalorder %s281, 15
        %s283 = scalar_select %p282, %s281, 15
        %p284 = scmp.lt.s32.totalorder %s19, 1
        %s285 = scalar_select %p284, %s19, 1
        %p286 = scmp.lt.s32.totalorder %s283, 15
        %s287 = scalar_select %p286, %s283, 15
        %s288 = smul.addr %s287, 2
        %s289 = smul.addr %s285, 32
        %s290 = sadd.s32 %s288, %s289
        %s291 = smul.addr %s290, 8
        %s292 = scalar_lea.vmem %s2, %s291
        %s293 = smul.u32 %s20, 16
        %s294 = sadd.s32 %s293, 16
        %p295 = scmp.lt.s32.totalorder %s294, 15
        %s296 = scalar_select %p295, %s294, 15
      $region40: #{tpu_custom_call.1} parent=27 // pred_fallthru
        _
    $region28: #{tpu_custom_call.1} parent=5 // pred_fallthru
      _
    %p297 = scmp.le.s32.totalorder 1, %s12
    %p298 = scmp.lt.s32.totalorder %s12, 3
    %p299 = pnand %p297, %p298
    %p300 = pneg %p299
    // Predicated region
    $region41: #{tpu_custom_call.1} parent=5 // pred_check
      _
    $region42: #{tpu_custom_call.1} parent=5 // pred_check_branch
      %302 = sbr.rel (%p299) target = $region44
    $region43: #{tpu_custom_call.1} parent=5 // pred_region
      %s303 = ssub.s32 %s12, 1
      %s304 = smul.u32 16, %s22
      %p305 = scmp.lt.s32.totalorder %s21, 1
      %s306 = scalar_select %p305, %s21, 1
      %p307 = scmp.lt.s32.totalorder %s304, 15
      %s308 = scalar_select %p307, %s304, 15
      %s309 = smul.addr %s308, 2
      %s310 = smul.addr %s306, 32
      %s311 = sadd.s32 %s309, %s310
      %s312 = smul.addr %s311, 8
      %s313 = scalar_lea.vmem %s0, %s312
      %p314 = pneg %p52
      %p315 = pneg %p49
      %s316 = smul.u32 %s22, 16
      %s317 = ssub.s32 %s316, 1
      %p318 = scmp.gt.s32.totalorder %s317, 0
      %s319 = scalar_select %p318, %s317, 0
      %p320 = scmp.lt.s32.totalorder %s21, 1
      %s321 = scalar_select %p320, %s21, 1
      %p322 = scmp.lt.s32.totalorder %s319, 15
      %s323 = scalar_select %p322, %s319, 15
      %s324 = smul.addr %s323, 2
      %s325 = smul.addr %s321, 32
      %s326 = sadd.s32 %s324, %s325
      %s327 = smul.addr %s326, 8
      %s328 = scalar_lea.vmem %s1, %s327
      %p329 = pneg %p88
      %p330 = pneg %p85
      %s331 = smul.u32 %s22, 16
      %s332 = sadd.s32 %s331, 16
      %p333 = scmp.lt.s32.totalorder %s332, 15
      %s334 = scalar_select %p333, %s332, 15
      %p335 = scmp.lt.s32.totalorder %s21, 1
      %s336 = scalar_select %p335, %s21, 1
      %p337 = scmp.lt.s32.totalorder %s334, 15
      %s338 = scalar_select %p337, %s334, 15
      %s339 = smul.addr %s338, 2
      %s340 = smul.addr %s336, 32
      %s341 = sadd.s32 %s339, %s340
      %s342 = smul.addr %s341, 8
      %s343 = scalar_lea.vmem %s2, %s342
      %p344 = pneg %p124
      %p345 = pneg %p121
      %p346 = pneg %p145
      %p347 = pneg %p142
      %p348 = pneg %p166
      %p349 = pneg %p163
      %p350 = pneg %p187
      %p351 = pneg %p184
      %p352 = pneg %p215
      %p353 = pneg %p212
      %s354 = smul.u32 16, %s22
      %p355 = scmp.lt.s32.totalorder %s21, 1
      %s356 = scalar_select %p355, %s21, 1
      %p357 = scmp.lt.s32.totalorder %s354, 15
      %s358 = scalar_select %p357, %s354, 15
      %s359 = smul.addr %s358, 2
      %s360 = smul.addr %s356, 32
      %s361 = sadd.s32 %s359, %s360
      %s362 = smul.addr %s361, 8
      %s363 = scalar_lea.vmem %s6, %s362
      %s364 = smul.u32 16, %s22
      %p365 = scmp.lt.s32.totalorder %s21, 1
      %s366 = scalar_select %p365, %s21, 1
      %p367 = scmp.lt.s32.totalorder %s364, 15
      %s368 = scalar_select %p367, %s364, 15
      %s369 = smul.addr %s368, 2
      %s370 = smul.addr %s366, 32
      %s371 = sadd.s32 %s369, %s370
      %s372 = smul.addr %s371, 8
      %s373 = scalar_lea.vmem %s0, %s372
      %s374 = smul.u32 16, %s22
      %s375 = smul.u32 %s22, 16
      %s376 = ssub.s32 %s375, 1
      %p377 = scmp.gt.s32.totalorder %s376, 0
      %s378 = scalar_select %p377, %s376, 0
      %p379 = scmp.lt.s32.totalorder %s21, 1
      %s380 = scalar_select %p379, %s21, 1
      %p381 = scmp.lt.s32.totalorder %s378, 15
      %s382 = scalar_select %p381, %s378, 15
      %s383 = smul.addr %s382, 2
      %s384 = smul.addr %s380, 32
      %s385 = sadd.s32 %s383, %s384
      %s386 = smul.addr %s385, 8
      %s387 = scalar_lea.vmem %s1, %s386
      %s388 = smul.u32 %s22, 16
      %s389 = ssub.s32 %s388, 1
      %p390 = scmp.gt.s32.totalorder %s389, 0
      %s391 = scalar_select %p390, %s389, 0
      %s392 = smul.u32 %s22, 16
      %s393 = sadd.s32 %s392, 16
      %p394 = scmp.lt.s32.totalorder %s393, 15
      %s395 = scalar_select %p394, %s393, 15
      %p396 = scmp.lt.s32.totalorder %s21, 1
      %s397 = scalar_select %p396, %s21, 1
      %p398 = scmp.lt.s32.totalorder %s395, 15
      %s399 = scalar_select %p398, %s395, 15
      %s400 = smul.addr %s399, 2
      %s401 = smul.addr %s397, 32
      %s402 = sadd.s32 %s400, %s401
      %s403 = smul.addr %s402, 8
      %s404 = scalar_lea.vmem %s2, %s403
      %s405 = smul.u32 %s22, 16
      %s406 = sadd.s32 %s405, 16
      %p407 = scmp.lt.s32.totalorder %s406, 15
      %s408 = scalar_select %p407, %s406, 15
      %s409 = smul.u32 16, %s22
      %p410 = scmp.lt.s32.totalorder %s21, 1
      %s411 = scalar_select %p410, %s21, 1
      %p412 = scmp.lt.s32.totalorder %s409, 15
      %s413 = scalar_select %p412, %s409, 15
      %s414 = smul.addr %s413, 2
      %s415 = smul.addr %s411, 32
      %s416 = sadd.s32 %s414, %s415
      %s417 = smul.addr %s416, 8
      %s418 = scalar_lea.vmem %s6, %s417
      %s419 = smul.u32 16, %s22
      %v420 = vld [vmem:[%s373] sm:$0xff]
      %v421 = vld [vmem:[%s373 + $0x8] sm:$0xff]
      %v422 = vld [vmem:[%s373 + $0x10] sm:$0xff]
      %v423 = vld [vmem:[%s373 + $0x18] sm:$0xff]
      %v424 = vld [vmem:[%s373 + $0x20] sm:$0xff]
      %v425 = vld [vmem:[%s373 + $0x28] sm:$0xff]
      %v426 = vld [vmem:[%s373 + $0x30] sm:$0xff]
      %v427 = vld [vmem:[%s373 + $0x38] sm:$0xff]
      %v428 = vld [vmem:[%s373 + $0x40] sm:$0xff]
      %v429 = vld [vmem:[%s373 + $0x48] sm:$0xff]
      %v430 = vld [vmem:[%s373 + $0x50] sm:$0xff]
      %v431 = vld [vmem:[%s373 + $0x58] sm:$0xff]
      %v432 = vld [vmem:[%s373 + $0x60] sm:$0xff]
      %v433 = vld [vmem:[%s373 + $0x68] sm:$0xff]
      %v434 = vld [vmem:[%s373 + $0x70] sm:$0xff]
      %v435 = vld [vmem:[%s373 + $0x78] sm:$0xff]
      %v436 = vld [vmem:[%s373 + $0x80] sm:$0xff]
      %v437 = vld [vmem:[%s373 + $0x88] sm:$0xff]
      %v438 = vld [vmem:[%s373 + $0x90] sm:$0xff]
      %v439 = vld [vmem:[%s373 + $0x98] sm:$0xff]
      %v440 = vld [vmem:[%s373 + $0xa0] sm:$0xff]
      %v441 = vld [vmem:[%s373 + $0xa8] sm:$0xff]
      %v442 = vld [vmem:[%s373 + $0xb0] sm:$0xff]
      %v443 = vld [vmem:[%s373 + $0xb8] sm:$0xff]
      %v444 = vld [vmem:[%s373 + $0xc0] sm:$0xff]
      %v445 = vld [vmem:[%s373 + $0xc8] sm:$0xff]
      %v446 = vld [vmem:[%s373 + $0xd0] sm:$0xff]
      %v447 = vld [vmem:[%s373 + $0xd8] sm:$0xff]
      %v448 = vld [vmem:[%s373 + $0xe0] sm:$0xff]
      %v449 = vld [vmem:[%s373 + $0xe8] sm:$0xff]
      %v450 = vld [vmem:[%s373 + $0xf0] sm:$0xff]
      %v451 = vld [vmem:[%s373 + $0xf8] sm:$0xff]
      %s452 = scalar_lea.vmem [#allocation2], 16
      %vm453 = vcmask 31744
      %454 = vst.msk [vmem:[%s452] sm:$0xff] %vm453, %v420
      %455 = vst.msk [vmem:[%s452 + $0x8] sm:$0xff] %vm453, %v421
      %456 = vst.msk [vmem:[%s452 + $0x10] sm:$0xff] %vm453, %v422
      %457 = vst.msk [vmem:[%s452 + $0x18] sm:$0xff] %vm453, %v423
      %458 = vst.msk [vmem:[%s452 + $0x20] sm:$0xff] %vm453, %v424
      %459 = vst.msk [vmem:[%s452 + $0x28] sm:$0xff] %vm453, %v425
      %460 = vst.msk [vmem:[%s452 + $0x30] sm:$0xff] %vm453, %v426
      %461 = vst.msk [vmem:[%s452 + $0x38] sm:$0xff] %vm453, %v427
      %462 = vst.msk [vmem:[%s452 + $0x40] sm:$0xff] %vm453, %v428
      %463 = vst.msk [vmem:[%s452 + $0x48] sm:$0xff] %vm453, %v429
      %464 = vst.msk [vmem:[%s452 + $0x50] sm:$0xff] %vm453, %v430
      %465 = vst.msk [vmem:[%s452 + $0x58] sm:$0xff] %vm453, %v431
      %466 = vst.msk [vmem:[%s452 + $0x60] sm:$0xff] %vm453, %v432
      %467 = vst.msk [vmem:[%s452 + $0x68] sm:$0xff] %vm453, %v433
      %468 = vst.msk [vmem:[%s452 + $0x70] sm:$0xff] %vm453, %v434
      %469 = vst.msk [vmem:[%s452 + $0x78] sm:$0xff] %vm453, %v435
      %470 = vst.msk [vmem:[%s452 + $0x80] sm:$0xff] %vm453, %v436
      %471 = vst.msk [vmem:[%s452 + $0x88] sm:$0xff] %vm453, %v437
      %472 = vst.msk [vmem:[%s452 + $0x90] sm:$0xff] %vm453, %v438
      %473 = vst.msk [vmem:[%s452 + $0x98] sm:$0xff] %vm453, %v439
      %474 = vst.msk [vmem:[%s452 + $0xa0] sm:$0xff] %vm453, %v440
      %475 = vst.msk [vmem:[%s452 + $0xa8] sm:$0xff] %vm453, %v441
      %476 = vst.msk [vmem:[%s452 + $0xb0] sm:$0xff] %vm453, %v442
      %477 = vst.msk [vmem:[%s452 + $0xb8] sm:$0xff] %vm453, %v443
      %478 = vst.msk [vmem:[%s452 + $0xc0] sm:$0xff] %vm453, %v444
      %479 = vst.msk [vmem:[%s452 + $0xc8] sm:$0xff] %vm453, %v445
      %480 = vst.msk [vmem:[%s452 + $0xd0] sm:$0xff] %vm453, %v446
      %481 = vst.msk [vmem:[%s452 + $0xd8] sm:$0xff] %vm453, %v447
      %482 = vst.msk [vmem:[%s452 + $0xe0] sm:$0xff] %vm453, %v448
      %483 = vst.msk [vmem:[%s452 + $0xe8] sm:$0xff] %vm453, %v449
      %484 = vst.msk [vmem:[%s452 + $0xf0] sm:$0xff] %vm453, %v450
      %485 = vst.msk [vmem:[%s452 + $0xf8] sm:$0xff] %vm453, %v451
      %p486 = scmp.gt.s32.totalorder %s22, 0
      %s487 = scalar_select %p486, 1, 0
      %s488 = scvt.s32.f32 %s487
      %v489 = vld [vmem:[%s387] sm:$0xff]
      %v490 = vld [vmem:[%s387 + $0x8] sm:$0xff]
      %v491 = vstv %s488
      %v492 = vmul.f32 %v489, %v491
      %v493 = vmul.f32 %v490, %v491
      %494 = vst.msk [vmem:[#allocation2] sm:$0xff] %vm453, %v492
      %495 = vst.msk [vmem:[#allocation2 + $0x8] sm:$0xff] %vm453, %v493
      %p496 = scmp.lt.s32.totalorder %s22, 0
      %s497 = scalar_select %p496, 1, 0
      %s498 = scvt.s32.f32 %s497
      %v499 = vld [vmem:[%s404] sm:$0xff]
      %v500 = vld [vmem:[%s404 + $0x8] sm:$0xff]
      %v501 = vstv %s498
      %v502 = vmul.f32 %v499, %v501
      %v503 = vmul.f32 %v500, %v501
      %s504 = scalar_lea.vmem [#allocation2], 272
      %505 = vst.msk [vmem:[%s504] sm:$0xff] %vm453, %v502
      %506 = vst.msk [vmem:[%s504 + $0x8] sm:$0xff] %vm453, %v503
      %v507 = vld [vmem:[#allocation2] sm:$0xff]
      %v508 = vld [vmem:[#allocation2 + $0x8] sm:$0xff]
      %v509 = vld [vmem:[#allocation2 + $0x10] sm:$0xff]
      %v510 = vld [vmem:[#allocation2 + $0x18] sm:$0xff]
      %v511 = vld [vmem:[#allocation2 + $0x20] sm:$0xff]
      %v512 = vld [vmem:[#allocation2 + $0x28] sm:$0xff]
      %v513 = vld [vmem:[#allocation2 + $0x30] sm:$0xff]
      %v514 = vld [vmem:[#allocation2 + $0x38] sm:$0xff]
      %v515 = vld [vmem:[#allocation2 + $0x40] sm:$0xff]
      %v516 = vld [vmem:[#allocation2 + $0x48] sm:$0xff]
      %v517 = vld [vmem:[#allocation2 + $0x50] sm:$0xff]
      %v518 = vld [vmem:[#allocation2 + $0x58] sm:$0xff]
      %v519 = vld [vmem:[#allocation2 + $0x60] sm:$0xff]
      %v520 = vld [vmem:[#allocation2 + $0x68] sm:$0xff]
      %v521 = vld [vmem:[#allocation2 + $0x70] sm:$0xff]
      %v522 = vld [vmem:[#allocation2 + $0x78] sm:$0xff]
      %v523 = vld [vmem:[#allocation2 + $0x80] sm:$0xff]
      %v524 = vld [vmem:[#allocation2 + $0x88] sm:$0xff]
      %v525 = vld [vmem:[#allocation2 + $0x90] sm:$0xff]
      %v526 = vld [vmem:[#allocation2 + $0x98] sm:$0xff]
      %v527 = vld [vmem:[#allocation2 + $0xa0] sm:$0xff]
      %v528 = vld [vmem:[#allocation2 + $0xa8] sm:$0xff]
      %v529 = vld [vmem:[#allocation2 + $0xb0] sm:$0xff]
      %v530 = vld [vmem:[#allocation2 + $0xb8] sm:$0xff]
      %v531 = vld [vmem:[#allocation2 + $0xc0] sm:$0xff]
      %v532 = vld [vmem:[#allocation2 + $0xc8] sm:$0xff]
      %v533 = vld [vmem:[#allocation2 + $0xd0] sm:$0xff]
      %v534 = vld [vmem:[#allocation2 + $0xd8] sm:$0xff]
      %v535 = vld [vmem:[#allocation2 + $0xe0] sm:$0xff]
      %v536 = vld [vmem:[#allocation2 + $0xe8] sm:$0xff]
      %v537 = vld [vmem:[#allocation2 + $0xf0] sm:$0xff]
      %v538 = vld [vmem:[#allocation2 + $0xf8] sm:$0xff]
      %v539 = vld [vmem:[#allocation2 + $0x100] sm:$0xff]
      %v540 = vld [vmem:[#allocation2 + $0x108] sm:$0xff]
      %v541 = vld [vmem:[#allocation2 + $0x110] sm:$0xff]
      %v542 = vld [vmem:[#allocation2 + $0x118] sm:$0xff]
      %v543 = vlaneseq
      %v544 = vshrl.u32 %v543, 7
      %v545 = vadd.s32 %v544, 8
      %vm546 = vcmp.gt.s32.totalorder %v544, 0
      %vm547 = vcmp.gt.s32.totalorder %v545, 0
      %v548 = vrot.slane %v507, 7
      %v549 = vrot.slane %v509, 7
      %v550 = vrot.slane %v511, 7
      %v551 = vrot.slane %v513, 7
      %v552 = vrot.slane %v515, 7
      %v553 = vrot.slane %v517, 7
      %v554 = vrot.slane %v519, 7
      %v555 = vrot.slane %v521, 7
      %v556 = vrot.slane %v523, 7
      %v557 = vrot.slane %v525, 7
      %v558 = vrot.slane %v527, 7
      %v559 = vrot.slane %v529, 7
      %v560 = vrot.slane %v531, 7
      %v561 = vrot.slane %v533, 7
      %v562 = vrot.slane %v535, 7
      %v563 = vrot.slane %v537, 7
      %v564 = vrot.slane %v539, 7
      %v565 = vrot.slane %v541, 7
      %v566 = vrot.slane %v508, 7
      %v567 = vrot.slane %v510, 7
      %v568 = vrot.slane %v512, 7
      %v569 = vrot.slane %v514, 7
      %v570 = vrot.slane %v516, 7
      %v571 = vrot.slane %v518, 7
      %v572 = vrot.slane %v520, 7
      %v573 = vrot.slane %v522, 7
      %v574 = vrot.slane %v524, 7
      %v575 = vrot.slane %v526, 7
      %v576 = vrot.slane %v528, 7
      %v577 = vrot.slane %v530, 7
      %v578 = vrot.slane %v532, 7
      %v579 = vrot.slane %v534, 7
      %v580 = vrot.slane %v536, 7
      %v581 = vrot.slane %v538, 7
      %v582 = vrot.slane %v540, 7
      %v583 = vrot.slane %v542, 7
      %vm584 = vcmp.lt.s32.totalorder %v544, 1
      %v585 = vsel %vm584, %v548, %v566
      %v586 = vsel %vm584, %v549, %v567
      %v587 = vsel %vm584, %v550, %v568
      %v588 = vsel %vm584, %v551, %v569
      %v589 = vsel %vm584, %v552, %v570
      %v590 = vsel %vm584, %v553, %v571
      %v591 = vsel %vm584, %v554, %v572
      %v592 = vsel %vm584, %v555, %v573
      %v593 = vsel %vm584, %v556, %v574
      %v594 = vsel %vm584, %v557, %v575
      %v595 = vsel %vm584, %v558, %v576
      %v596 = vsel %vm584, %v559, %v577
      %v597 = vsel %vm584, %v560, %v578
      %v598 = vsel %vm584, %v561, %v579
      %v599 = vsel %vm584, %v562, %v580
      %v600 = vsel %vm584, %v563, %v581
      %v601 = vsel %vm584, %v564, %v582
      %v602 = vsel %vm584, %v565, %v583
      %v603 = vsel %vm584, %v566, %v548
      %v604 = vsel %vm584, %v567, %v549
      %v605 = vsel %vm584, %v568, %v550
      %v606 = vsel %vm584, %v569, %v551
      %v607 = vsel %vm584, %v570, %v552
      %v608 = vsel %vm584, %v571, %v553
      %v609 = vsel %vm584, %v572, %v554
      %v610 = vsel %vm584, %v573, %v555
      %v611 = vsel %vm584, %v574, %v556
      %v612 = vsel %vm584, %v575, %v557
      %v613 = vsel %vm584, %v576, %v558
      %v614 = vsel %vm584, %v577, %v559
      %v615 = vsel %vm584, %v578, %v560
      %v616 = vsel %vm584, %v579, %v561
      %v617 = vsel %vm584, %v580, %v562
      %v618 = vsel %vm584, %v581, %v563
      %v619 = vsel %vm584, %v582, %v564
      %v620 = vsel %vm584, %v583, %v565
      %v621 = vsel %vm546, 1, 0
      %v622 = vsel %vm547, 1, 0
      %vm623 = vcmp.eq.s32.totalorder %v621, 1
      %vm624 = vcmp.eq.s32.totalorder %v622, 1
      %v625 = vsel %vm623, %v603, 0.0
      %v626 = vsel %vm624, %v585, 0.0
      %v627 = vsel %vm623, %v604, 0.0
      %v628 = vsel %vm624, %v586, 0.0
      %v629 = vsel %vm623, %v605, 0.0
      %v630 = vsel %vm624, %v587, 0.0
      %v631 = vsel %vm623, %v606, 0.0
      %v632 = vsel %vm624, %v588, 0.0
      %v633 = vsel %vm623, %v607, 0.0
      %v634 = vsel %vm624, %v589, 0.0
      %v635 = vsel %vm623, %v608, 0.0
      %v636 = vsel %vm624, %v590, 0.0
      %v637 = vsel %vm623, %v609, 0.0
      %v638 = vsel %vm624, %v591, 0.0
      %v639 = vsel %vm623, %v610, 0.0
      %v640 = vsel %vm624, %v592, 0.0
      %v641 = vsel %vm623, %v611, 0.0
      %v642 = vsel %vm624, %v593, 0.0
      %v643 = vsel %vm623, %v612, 0.0
      %v644 = vsel %vm624, %v594, 0.0
      %v645 = vsel %vm623, %v613, 0.0
      %v646 = vsel %vm624, %v595, 0.0
      %v647 = vsel %vm623, %v614, 0.0
      %v648 = vsel %vm624, %v596, 0.0
      %v649 = vsel %vm623, %v615, 0.0
      %v650 = vsel %vm624, %v597, 0.0
      %v651 = vsel %vm623, %v616, 0.0
      %v652 = vsel %vm624, %v598, 0.0
      %v653 = vsel %vm623, %v617, 0.0
      %v654 = vsel %vm624, %v599, 0.0
      %v655 = vsel %vm623, %v618, 0.0
      %v656 = vsel %vm624, %v600, 0.0
      %v657 = vsel %vm623, %v619, 0.0
      %v658 = vsel %vm624, %v601, 0.0
      %v659 = vsel %vm623, %v620, 0.0
      %v660 = vsel %vm624, %v602, 0.0
      %vm661 = vcmp.lt.s32.totalorder %v544, 15
      %vm662 = vcmp.lt.s32.totalorder %v545, 15
      %v663 = vrot.slane %v507, 1
      %v664 = vrot.slane %v509, 1
      %v665 = vrot.slane %v511, 1
      %v666 = vrot.slane %v513, 1
      %v667 = vrot.slane %v515, 1
      %v668 = vrot.slane %v517, 1
      %v669 = vrot.slane %v519, 1
      %v670 = vrot.slane %v521, 1
      %v671 = vrot.slane %v523, 1
      %v672 = vrot.slane %v525, 1
      %v673 = vrot.slane %v527, 1
      %v674 = vrot.slane %v529, 1
      %v675 = vrot.slane %v531, 1
      %v676 = vrot.slane %v533, 1
      %v677 = vrot.slane %v535, 1
      %v678 = vrot.slane %v537, 1
      %v679 = vrot.slane %v539, 1
      %v680 = vrot.slane %v541, 1
      %v681 = vrot.slane %v508, 1
      %v682 = vrot.slane %v510, 1
      %v683 = vrot.slane %v512, 1
      %v684 = vrot.slane %v514, 1
      %v685 = vrot.slane %v516, 1
      %v686 = vrot.slane %v518, 1
      %v687 = vrot.slane %v520, 1
      %v688 = vrot.slane %v522, 1
      %v689 = vrot.slane %v524, 1
      %v690 = vrot.slane %v526, 1
      %v691 = vrot.slane %v528, 1
      %v692 = vrot.slane %v530, 1
      %v693 = vrot.slane %v532, 1
      %v694 = vrot.slane %v534, 1
      %v695 = vrot.slane %v536, 1
      %v696 = vrot.slane %v538, 1
      %v697 = vrot.slane %v540, 1
      %v698 = vrot.slane %v542, 1
      %vm699 = vcmp.lt.s32.totalorder %v544, 7
      %v700 = vsel %vm699, %v663, %v681
      %v701 = vsel %vm699, %v664, %v682
      %v702 = vsel %vm699, %v665, %v683
      %v703 = vsel %vm699, %v666, %v684
      %v704 = vsel %vm699, %v667, %v685
      %v705 = vsel %vm699, %v668, %v686
      %v706 = vsel %vm699, %v669, %v687
      %v707 = vsel %vm699, %v670, %v688
      %v708 = vsel %vm699, %v671, %v689
      %v709 = vsel %vm699, %v672, %v690
      %v710 = vsel %vm699, %v673, %v691
      %v711 = vsel %vm699, %v674, %v692
      %v712 = vsel %vm699, %v675, %v693
      %v713 = vsel %vm699, %v676, %v694
      %v714 = vsel %vm699, %v677, %v695
      %v715 = vsel %vm699, %v678, %v696
      %v716 = vsel %vm699, %v679, %v697
      %v717 = vsel %vm699, %v680, %v698
      %v718 = vsel %vm699, %v681, %v663
      %v719 = vsel %vm699, %v682, %v664
      %v720 = vsel %vm699, %v683, %v665
      %v721 = vsel %vm699, %v684, %v666
      %v722 = vsel %vm699, %v685, %v667
      %v723 = vsel %vm699, %v686, %v668
      %v724 = vsel %vm699, %v687, %v669
      %v725 = vsel %vm699, %v688, %v670
      %v726 = vsel %vm699, %v689, %v671
      %v727 = vsel %vm699, %v690, %v672
      %v728 = vsel %vm699, %v691, %v673
      %v729 = vsel %vm699, %v692, %v674
      %v730 = vsel %vm699, %v693, %v675
      %v731 = vsel %vm699, %v694, %v676
      %v732 = vsel %vm699, %v695, %v677
      %v733 = vsel %vm699, %v696, %v678
      %v734 = vsel %vm699, %v697, %v679
      %v735 = vsel %vm699, %v698, %v680
      %v736 = vsel %vm661, 1, 0
      %v737 = vsel %vm662, 1, 0
      %vm738 = vcmp.eq.s32.totalorder %v736, 1
      %vm739 = vcmp.eq.s32.totalorder %v737, 1
      %v740 = vsel %vm738, %v700, 0.0
      %v741 = vsel %vm739, %v718, 0.0
      %v742 = vsel %vm738, %v701, 0.0
      %v743 = vsel %vm739, %v719, 0.0
      %v744 = vsel %vm738, %v702, 0.0
      %v745 = vsel %vm739, %v720, 0.0
      %v746 = vsel %vm738, %v703, 0.0
      %v747 = vsel %vm739, %v721, 0.0
      %v748 = vsel %vm738, %v704, 0.0
      %v749 = vsel %vm739, %v722, 0.0
      %v750 = vsel %vm738, %v705, 0.0
      %v751 = vsel %vm739, %v723, 0.0
      %v752 = vsel %vm738, %v706, 0.0
      %v753 = vsel %vm739, %v724, 0.0
      %v754 = vsel %vm738, %v707, 0.0
      %v755 = vsel %vm739, %v725, 0.0
      %v756 = vsel %vm738, %v708, 0.0
      %v757 = vsel %vm739, %v726, 0.0
      %v758 = vsel %vm738, %v709, 0.0
      %v759 = vsel %vm739, %v727, 0.0
      %v760 = vsel %vm738, %v710, 0.0
      %v761 = vsel %vm739, %v728, 0.0
      %v762 = vsel %vm738, %v711, 0.0
      %v763 = vsel %vm739, %v729, 0.0
      %v764 = vsel %vm738, %v712, 0.0
      %v765 = vsel %vm739, %v730, 0.0
      %v766 = vsel %vm738, %v713, 0.0
      %v767 = vsel %vm739, %v731, 0.0
      %v768 = vsel %vm738, %v714, 0.0
      %v769 = vsel %vm739, %v732, 0.0
      %v770 = vsel %vm738, %v715, 0.0
      %v771 = vsel %vm739, %v733, 0.0
      %v772 = vsel %vm738, %v716, 0.0
      %v773 = vsel %vm739, %v734, 0.0
      %v774 = vsel %vm738, %v717, 0.0
      %v775 = vsel %vm739, %v735, 0.0
      %v776 = vld [vmem:[%s3] sm:$0xff]
      %v777 = vld [vmem:[%s3 + $0x8] sm:$0x1]
      %v778 = vlaneseq
      %v779 = vshrl.u32 %v778, 7
      %v780 = vsub.s32 0, %v779
      %v781 = vrot.slane %v776, %v780
      %v782 = vmul.f32 %v625, %v781
      %v783 = vmul.f32 %v626, %v781
      %v784 = vmul.f32 %v627, %v781
      %v785 = vmul.f32 %v628, %v781
      %v786 = vmul.f32 %v629, %v781
      %v787 = vmul.f32 %v630, %v781
      %v788 = vmul.f32 %v631, %v781
      %v789 = vmul.f32 %v632, %v781
      %v790 = vmul.f32 %v633, %v781
      %v791 = vmul.f32 %v634, %v781
      %v792 = vmul.f32 %v635, %v781
      %v793 = vmul.f32 %v636, %v781
      %v794 = vmul.f32 %v637, %v781
      %v795 = vmul.f32 %v638, %v781
      %v796 = vmul.f32 %v639, %v781
      %v797 = vmul.f32 %v640, %v781
      %v798 = vmul.f32 %v641, %v781
      %v799 = vmul.f32 %v642, %v781
      %v800 = vmul.f32 %v643, %v781
      %v801 = vmul.f32 %v644, %v781
      %v802 = vmul.f32 %v645, %v781
      %v803 = vmul.f32 %v646, %v781
      %v804 = vmul.f32 %v647, %v781
      %v805 = vmul.f32 %v648, %v781
      %v806 = vmul.f32 %v649, %v781
      %v807 = vmul.f32 %v650, %v781
      %v808 = vmul.f32 %v651, %v781
      %v809 = vmul.f32 %v652, %v781
      %v810 = vmul.f32 %v653, %v781
      %v811 = vmul.f32 %v654, %v781
      %v812 = vmul.f32 %v655, %v781
      %v813 = vmul.f32 %v656, %v781
      %v814 = vlaneseq
      %v815 = vshrl.u32 %v814, 7
      %v816 = vsub.s32 1, %v815
      %v817 = vrot.slane %v776, %v816
      %v818 = vmul.f32 %v507, %v817
      %v819 = vmul.f32 %v508, %v817
      %v820 = vmul.f32 %v509, %v817
      %v821 = vmul.f32 %v510, %v817
      %v822 = vmul.f32 %v511, %v817
      %v823 = vmul.f32 %v512, %v817
      %v824 = vmul.f32 %v513, %v817
      %v825 = vmul.f32 %v514, %v817
      %v826 = vmul.f32 %v515, %v817
      %v827 = vmul.f32 %v516, %v817
      %v828 = vmul.f32 %v517, %v817
      %v829 = vmul.f32 %v518, %v817
      %v830 = vmul.f32 %v519, %v817
      %v831 = vmul.f32 %v520, %v817
      %v832 = vmul.f32 %v521, %v817
      %v833 = vmul.f32 %v522, %v817
      %v834 = vmul.f32 %v523, %v817
      %v835 = vmul.f32 %v524, %v817
      %v836 = vmul.f32 %v525, %v817
      %v837 = vmul.f32 %v526, %v817
      %v838 = vmul.f32 %v527, %v817
      %v839 = vmul.f32 %v528, %v817
      %v840 = vmul.f32 %v529, %v817
      %v841 = vmul.f32 %v530, %v817
      %v842 = vmul.f32 %v531, %v817
      %v843 = vmul.f32 %v532, %v817
      %v844 = vmul.f32 %v533, %v817
      %v845 = vmul.f32 %v534, %v817
      %v846 = vmul.f32 %v535, %v817
      %v847 = vmul.f32 %v536, %v817
      %v848 = vmul.f32 %v537, %v817
      %v849 = vmul.f32 %v538, %v817
      %v850 = vadd.f32 %v782, %v818
      %v851 = vadd.f32 %v783, %v819
      %v852 = vadd.f32 %v784, %v820
      %v853 = vadd.f32 %v785, %v821
      %v854 = vadd.f32 %v786, %v822
      %v855 = vadd.f32 %v787, %v823
      %v856 = vadd.f32 %v788, %v824
      %v857 = vadd.f32 %v789, %v825
      %v858 = vadd.f32 %v790, %v826
      %v859 = vadd.f32 %v791, %v827
      %v860 = vadd.f32 %v792, %v828
      %v861 = vadd.f32 %v793, %v829
      %v862 = vadd.f32 %v794, %v830
      %v863 = vadd.f32 %v795, %v831
      %v864 = vadd.f32 %v796, %v832
      %v865 = vadd.f32 %v797, %v833
      %v866 = vadd.f32 %v798, %v834
      %v867 = vadd.f32 %v799, %v835
      %v868 = vadd.f32 %v800, %v836
      %v869 = vadd.f32 %v801, %v837
      %v870 = vadd.f32 %v802, %v838
      %v871 = vadd.f32 %v803, %v839
      %v872 = vadd.f32 %v804, %v840
      %v873 = vadd.f32 %v805, %v841
      %v874 = vadd.f32 %v806, %v842
      %v875 = vadd.f32 %v807, %v843
      %v876 = vadd.f32 %v808, %v844
      %v877 = vadd.f32 %v809, %v845
      %v878 = vadd.f32 %v810, %v846
      %v879 = vadd.f32 %v811, %v847
      %v880 = vadd.f32 %v812, %v848
      %v881 = vadd.f32 %v813, %v849
      %v882 = vlaneseq
      %v883 = vshrl.u32 %v882, 7
      %v884 = vsub.s32 2, %v883
      %v885 = vrot.slane %v776, %v884
      %v886 = vmul.f32 %v740, %v885
      %v887 = vmul.f32 %v741, %v885
      %v888 = vmul.f32 %v742, %v885
      %v889 = vmul.f32 %v743, %v885
      %v890 = vmul.f32 %v744, %v885
      %v891 = vmul.f32 %v745, %v885
      %v892 = vmul.f32 %v746, %v885
      %v893 = vmul.f32 %v747, %v885
      %v894 = vmul.f32 %v748, %v885
      %v895 = vmul.f32 %v749, %v885
      %v896 = vmul.f32 %v750, %v885
      %v897 = vmul.f32 %v751, %v885
      %v898 = vmul.f32 %v752, %v885
      %v899 = vmul.f32 %v753, %v885
      %v900 = vmul.f32 %v754, %v885
      %v901 = vmul.f32 %v755, %v885
      %v902 = vmul.f32 %v756, %v885
      %v903 = vmul.f32 %v757, %v885
      %v904 = vmul.f32 %v758, %v885
      %v905 = vmul.f32 %v759, %v885
      %v906 = vmul.f32 %v760, %v885
      %v907 = vmul.f32 %v761, %v885
      %v908 = vmul.f32 %v762, %v885
      %v909 = vmul.f32 %v763, %v885
      %v910 = vmul.f32 %v764, %v885
      %v911 = vmul.f32 %v765, %v885
      %v912 = vmul.f32 %v766, %v885
      %v913 = vmul.f32 %v767, %v885
      %v914 = vmul.f32 %v768, %v885
      %v915 = vmul.f32 %v769, %v885
      %v916 = vmul.f32 %v770, %v885
      %v917 = vmul.f32 %v771, %v885
      %v918 = vadd.f32 %v850, %v886
      %v919 = vadd.f32 %v851, %v887
      %v920 = vadd.f32 %v852, %v888
      %v921 = vadd.f32 %v853, %v889
      %v922 = vadd.f32 %v854, %v890
      %v923 = vadd.f32 %v855, %v891
      %v924 = vadd.f32 %v856, %v892
      %v925 = vadd.f32 %v857, %v893
      %v926 = vadd.f32 %v858, %v894
      %v927 = vadd.f32 %v859, %v895
      %v928 = vadd.f32 %v860, %v896
      %v929 = vadd.f32 %v861, %v897
      %v930 = vadd.f32 %v862, %v898
      %v931 = vadd.f32 %v863, %v899
      %v932 = vadd.f32 %v864, %v900
      %v933 = vadd.f32 %v865, %v901
      %v934 = vadd.f32 %v866, %v902
      %v935 = vadd.f32 %v867, %v903
      %v936 = vadd.f32 %v868, %v904
      %v937 = vadd.f32 %v869, %v905
      %v938 = vadd.f32 %v870, %v906
      %v939 = vadd.f32 %v871, %v907
      %v940 = vadd.f32 %v872, %v908
      %v941 = vadd.f32 %v873, %v909
      %v942 = vadd.f32 %v874, %v910
      %v943 = vadd.f32 %v875, %v911
      %v944 = vadd.f32 %v876, %v912
      %v945 = vadd.f32 %v877, %v913
      %v946 = vadd.f32 %v878, %v914
      %v947 = vadd.f32 %v879, %v915
      %v948 = vadd.f32 %v880, %v916
      %v949 = vadd.f32 %v881, %v917
      %v950 = vlaneseq
      %v951 = vshrl.u32 %v950, 7
      %v952 = vsub.s32 3, %v951
      %v953 = vrot.slane %v776, %v952
      %v954 = vmul.f32 %v627, %v953
      %v955 = vmul.f32 %v628, %v953
      %v956 = vmul.f32 %v629, %v953
      %v957 = vmul.f32 %v630, %v953
      %v958 = vmul.f32 %v631, %v953
      %v959 = vmul.f32 %v632, %v953
      %v960 = vmul.f32 %v633, %v953
      %v961 = vmul.f32 %v634, %v953
      %v962 = vmul.f32 %v635, %v953
      %v963 = vmul.f32 %v636, %v953
      %v964 = vmul.f32 %v637, %v953
      %v965 = vmul.f32 %v638, %v953
      %v966 = vmul.f32 %v639, %v953
      %v967 = vmul.f32 %v640, %v953
      %v968 = vmul.f32 %v641, %v953
      %v969 = vmul.f32 %v642, %v953
      %v970 = vmul.f32 %v643, %v953
      %v971 = vmul.f32 %v644, %v953
      %v972 = vmul.f32 %v645, %v953
      %v973 = vmul.f32 %v646, %v953
      %v974 = vmul.f32 %v647, %v953
      %v975 = vmul.f32 %v648, %v953
      %v976 = vmul.f32 %v649, %v953
      %v977 = vmul.f32 %v650, %v953
      %v978 = vmul.f32 %v651, %v953
      %v979 = vmul.f32 %v652, %v953
      %v980 = vmul.f32 %v653, %v953
      %v981 = vmul.f32 %v654, %v953
      %v982 = vmul.f32 %v655, %v953
      %v983 = vmul.f32 %v656, %v953
      %v984 = vmul.f32 %v657, %v953
      %v985 = vmul.f32 %v658, %v953
      %v986 = vadd.f32 %v918, %v954
      %v987 = vadd.f32 %v919, %v955
      %v988 = vadd.f32 %v920, %v956
      %v989 = vadd.f32 %v921, %v957
      %v990 = vadd.f32 %v922, %v958
      %v991 = vadd.f32 %v923, %v959
      %v992 = vadd.f32 %v924, %v960
      %v993 = vadd.f32 %v925, %v961
      %v994 = vadd.f32 %v926, %v962
      %v995 = vadd.f32 %v927, %v963
      %v996 = vadd.f32 %v928, %v964
      %v997 = vadd.f32 %v929, %v965
      %v998 = vadd.f32 %v930, %v966
      %v999 = vadd.f32 %v931, %v967
      %v1000 = vadd.f32 %v932, %v968
      %v1001 = vadd.f32 %v933, %v969
      %v1002 = vadd.f32 %v934, %v970
      %v1003 = vadd.f32 %v935, %v971
      %v1004 = vadd.f32 %v936, %v972
      %v1005 = vadd.f32 %v937, %v973
      %v1006 = vadd.f32 %v938, %v974
      %v1007 = vadd.f32 %v939, %v975
      %v1008 = vadd.f32 %v940, %v976
      %v1009 = vadd.f32 %v941, %v977
      %v1010 = vadd.f32 %v942, %v978
      %v1011 = vadd.f32 %v943, %v979
      %v1012 = vadd.f32 %v944, %v980
      %v1013 = vadd.f32 %v945, %v981
      %v1014 = vadd.f32 %v946, %v982
      %v1015 = vadd.f32 %v947, %v983
      %v1016 = vadd.f32 %v948, %v984
      %v1017 = vadd.f32 %v949, %v985
      %v1018 = vlaneseq
      %v1019 = vshrl.u32 %v1018, 7
      %v1020 = vsub.s32 4, %v1019
      %v1021 = vrot.slane %v776, %v1020
      %v1022 = vmul.f32 %v509, %v1021
      %v1023 = vmul.f32 %v510, %v1021
      %v1024 = vmul.f32 %v511, %v1021
      %v1025 = vmul.f32 %v512, %v1021
      %v1026 = vmul.f32 %v513, %v1021
      %v1027 = vmul.f32 %v514, %v1021
      %v1028 = vmul.f32 %v515, %v1021
      %v1029 = vmul.f32 %v516, %v1021
      %v1030 = vmul.f32 %v517, %v1021
      %v1031 = vmul.f32 %v518, %v1021
      %v1032 = vmul.f32 %v519, %v1021
      %v1033 = vmul.f32 %v520, %v1021
      %v1034 = vmul.f32 %v521, %v1021
      %v1035 = vmul.f32 %v522, %v1021
      %v1036 = vmul.f32 %v523, %v1021
      %v1037 = vmul.f32 %v524, %v1021
      %v1038 = vmul.f32 %v525, %v1021
      %v1039 = vmul.f32 %v526, %v1021
      %v1040 = vmul.f32 %v527, %v1021
      %v1041 = vmul.f32 %v528, %v1021
      %v1042 = vmul.f32 %v529, %v1021
      %v1043 = vmul.f32 %v530, %v1021
      %v1044 = vmul.f32 %v531, %v1021
      %v1045 = vmul.f32 %v532, %v1021
      %v1046 = vmul.f32 %v533, %v1021
      %v1047 = vmul.f32 %v534, %v1021
      %v1048 = vmul.f32 %v535, %v1021
      %v1049 = vmul.f32 %v536, %v1021
      %v1050 = vmul.f32 %v537, %v1021
      %v1051 = vmul.f32 %v538, %v1021
      %v1052 = vmul.f32 %v539, %v1021
      %v1053 = vmul.f32 %v540, %v1021
      %v1054 = vadd.f32 %v986, %v1022
      %v1055 = vadd.f32 %v987, %v1023
      %v1056 = vadd.f32 %v988, %v1024
      %v1057 = vadd.f32 %v989, %v1025
      %v1058 = vadd.f32 %v990, %v1026
      %v1059 = vadd.f32 %v991, %v1027
      %v1060 = vadd.f32 %v992, %v1028
      %v1061 = vadd.f32 %v993, %v1029
      %v1062 = vadd.f32 %v994, %v1030
      %v1063 = vadd.f32 %v995, %v1031
      %v1064 = vadd.f32 %v996, %v1032
      %v1065 = vadd.f32 %v997, %v1033
      %v1066 = vadd.f32 %v998, %v1034
      %v1067 = vadd.f32 %v999, %v1035
      %v1068 = vadd.f32 %v1000, %v1036
      %v1069 = vadd.f32 %v1001, %v1037
      %v1070 = vadd.f32 %v1002, %v1038
      %v1071 = vadd.f32 %v1003, %v1039
      %v1072 = vadd.f32 %v1004, %v1040
      %v1073 = vadd.f32 %v1005, %v1041
      %v1074 = vadd.f32 %v1006, %v1042
      %v1075 = vadd.f32 %v1007, %v1043
      %v1076 = vadd.f32 %v1008, %v1044
      %v1077 = vadd.f32 %v1009, %v1045
      %v1078 = vadd.f32 %v1010, %v1046
      %v1079 = vadd.f32 %v1011, %v1047
      %v1080 = vadd.f32 %v1012, %v1048
      %v1081 = vadd.f32 %v1013, %v1049
      %v1082 = vadd.f32 %v1014, %v1050
      %v1083 = vadd.f32 %v1015, %v1051
      %v1084 = vadd.f32 %v1016, %v1052
      %v1085 = vadd.f32 %v1017, %v1053
      %v1086 = vlaneseq
      %v1087 = vshrl.u32 %v1086, 7
      %v1088 = vsub.s32 5, %v1087
      %v1089 = vrot.slane %v776, %v1088
      %v1090 = vmul.f32 %v742, %v1089
      %v1091 = vmul.f32 %v743, %v1089
      %v1092 = vmul.f32 %v744, %v1089
      %v1093 = vmul.f32 %v745, %v1089
      %v1094 = vmul.f32 %v746, %v1089
      %v1095 = vmul.f32 %v747, %v1089
      %v1096 = vmul.f32 %v748, %v1089
      %v1097 = vmul.f32 %v749, %v1089
      %v1098 = vmul.f32 %v750, %v1089
      %v1099 = vmul.f32 %v751, %v1089
      %v1100 = vmul.f32 %v752, %v1089
      %v1101 = vmul.f32 %v753, %v1089
      %v1102 = vmul.f32 %v754, %v1089
      %v1103 = vmul.f32 %v755, %v1089
      %v1104 = vmul.f32 %v756, %v1089
      %v1105 = vmul.f32 %v757, %v1089
      %v1106 = vmul.f32 %v758, %v1089
      %v1107 = vmul.f32 %v759, %v1089
      %v1108 = vmul.f32 %v760, %v1089
      %v1109 = vmul.f32 %v761, %v1089
      %v1110 = vmul.f32 %v762, %v1089
      %v1111 = vmul.f32 %v763, %v1089
      %v1112 = vmul.f32 %v764, %v1089
      %v1113 = vmul.f32 %v765, %v1089
      %v1114 = vmul.f32 %v766, %v1089
      %v1115 = vmul.f32 %v767, %v1089
      %v1116 = vmul.f32 %v768, %v1089
      %v1117 = vmul.f32 %v769, %v1089
      %v1118 = vmul.f32 %v770, %v1089
      %v1119 = vmul.f32 %v771, %v1089
      %v1120 = vmul.f32 %v772, %v1089
      %v1121 = vmul.f32 %v773, %v1089
      %v1122 = vadd.f32 %v1054, %v1090
      %v1123 = vadd.f32 %v1055, %v1091
      %v1124 = vadd.f32 %v1056, %v1092
      %v1125 = vadd.f32 %v1057, %v1093
      %v1126 = vadd.f32 %v1058, %v1094
      %v1127 = vadd.f32 %v1059, %v1095
      %v1128 = vadd.f32 %v1060, %v1096
      %v1129 = vadd.f32 %v1061, %v1097
      %v1130 = vadd.f32 %v1062, %v1098
      %v1131 = vadd.f32 %v1063, %v1099
      %v1132 = vadd.f32 %v1064, %v1100
      %v1133 = vadd.f32 %v1065, %v1101
      %v1134 = vadd.f32 %v1066, %v1102
      %v1135 = vadd.f32 %v1067, %v1103
      %v1136 = vadd.f32 %v1068, %v1104
      %v1137 = vadd.f32 %v1069, %v1105
      %v1138 = vadd.f32 %v1070, %v1106
      %v1139 = vadd.f32 %v1071, %v1107
      %v1140 = vadd.f32 %v1072, %v1108
      %v1141 = vadd.f32 %v1073, %v1109
      %v1142 = vadd.f32 %v1074, %v1110
      %v1143 = vadd.f32 %v1075, %v1111
      %v1144 = vadd.f32 %v1076, %v1112
      %v1145 = vadd.f32 %v1077, %v1113
      %v1146 = vadd.f32 %v1078, %v1114
      %v1147 = vadd.f32 %v1079, %v1115
      %v1148 = vadd.f32 %v1080, %v1116
      %v1149 = vadd.f32 %v1081, %v1117
      %v1150 = vadd.f32 %v1082, %v1118
      %v1151 = vadd.f32 %v1083, %v1119
      %v1152 = vadd.f32 %v1084, %v1120
      %v1153 = vadd.f32 %v1085, %v1121
      %v1154 = vlaneseq
      %v1155 = vshrl.u32 %v1154, 7
      %v1156 = vsub.s32 6, %v1155
      %v1157 = vrot.slane %v776, %v1156
      %v1158 = vmul.f32 %v629, %v1157
      %v1159 = vmul.f32 %v630, %v1157
      %v1160 = vmul.f32 %v631, %v1157
      %v1161 = vmul.f32 %v632, %v1157
      %v1162 = vmul.f32 %v633, %v1157
      %v1163 = vmul.f32 %v634, %v1157
      %v1164 = vmul.f32 %v635, %v1157
      %v1165 = vmul.f32 %v636, %v1157
      %v1166 = vmul.f32 %v637, %v1157
      %v1167 = vmul.f32 %v638, %v1157
      %v1168 = vmul.f32 %v639, %v1157
      %v1169 = vmul.f32 %v640, %v1157
      %v1170 = vmul.f32 %v641, %v1157
      %v1171 = vmul.f32 %v642, %v1157
      %v1172 = vmul.f32 %v643, %v1157
      %v1173 = vmul.f32 %v644, %v1157
      %v1174 = vmul.f32 %v645, %v1157
      %v1175 = vmul.f32 %v646, %v1157
      %v1176 = vmul.f32 %v647, %v1157
      %v1177 = vmul.f32 %v648, %v1157
      %v1178 = vmul.f32 %v649, %v1157
      %v1179 = vmul.f32 %v650, %v1157
      %v1180 = vmul.f32 %v651, %v1157
      %v1181 = vmul.f32 %v652, %v1157
      %v1182 = vmul.f32 %v653, %v1157
      %v1183 = vmul.f32 %v654, %v1157
      %v1184 = vmul.f32 %v655, %v1157
      %v1185 = vmul.f32 %v656, %v1157
      %v1186 = vmul.f32 %v657, %v1157
      %v1187 = vmul.f32 %v658, %v1157
      %v1188 = vmul.f32 %v659, %v1157
      %v1189 = vmul.f32 %v660, %v1157
      %v1190 = vadd.f32 %v1122, %v1158
      %v1191 = vadd.f32 %v1123, %v1159
      %v1192 = vadd.f32 %v1124, %v1160
      %v1193 = vadd.f32 %v1125, %v1161
      %v1194 = vadd.f32 %v1126, %v1162
      %v1195 = vadd.f32 %v1127, %v1163
      %v1196 = vadd.f32 %v1128, %v1164
      %v1197 = vadd.f32 %v1129, %v1165
      %v1198 = vadd.f32 %v1130, %v1166
      %v1199 = vadd.f32 %v1131, %v1167
      %v1200 = vadd.f32 %v1132, %v1168
      %v1201 = vadd.f32 %v1133, %v1169
      %v1202 = vadd.f32 %v1134, %v1170
      %v1203 = vadd.f32 %v1135, %v1171
      %v1204 = vadd.f32 %v1136, %v1172
      %v1205 = vadd.f32 %v1137, %v1173
      %v1206 = vadd.f32 %v1138, %v1174
      %v1207 = vadd.f32 %v1139, %v1175
      %v1208 = vadd.f32 %v1140, %v1176
      %v1209 = vadd.f32 %v1141, %v1177
      %v1210 = vadd.f32 %v1142, %v1178
      %v1211 = vadd.f32 %v1143, %v1179
      %v1212 = vadd.f32 %v1144, %v1180
      %v1213 = vadd.f32 %v1145, %v1181
      %v1214 = vadd.f32 %v1146, %v1182
      %v1215 = vadd.f32 %v1147, %v1183
      %v1216 = vadd.f32 %v1148, %v1184
      %v1217 = vadd.f32 %v1149, %v1185
      %v1218 = vadd.f32 %v1150, %v1186
      %v1219 = vadd.f32 %v1151, %v1187
      %v1220 = vadd.f32 %v1152, %v1188
      %v1221 = vadd.f32 %v1153, %v1189
      %v1222 = vlaneseq
      %v1223 = vshrl.u32 %v1222, 7
      %v1224 = vsub.s32 7, %v1223
      %v1225 = vrot.slane %v776, %v1224
      %v1226 = vmul.f32 %v511, %v1225
      %v1227 = vmul.f32 %v512, %v1225
      %v1228 = vmul.f32 %v513, %v1225
      %v1229 = vmul.f32 %v514, %v1225
      %v1230 = vmul.f32 %v515, %v1225
      %v1231 = vmul.f32 %v516, %v1225
      %v1232 = vmul.f32 %v517, %v1225
      %v1233 = vmul.f32 %v518, %v1225
      %v1234 = vmul.f32 %v519, %v1225
      %v1235 = vmul.f32 %v520, %v1225
      %v1236 = vmul.f32 %v521, %v1225
      %v1237 = vmul.f32 %v522, %v1225
      %v1238 = vmul.f32 %v523, %v1225
      %v1239 = vmul.f32 %v524, %v1225
      %v1240 = vmul.f32 %v525, %v1225
      %v1241 = vmul.f32 %v526, %v1225
      %v1242 = vmul.f32 %v527, %v1225
      %v1243 = vmul.f32 %v528, %v1225
      %v1244 = vmul.f32 %v529, %v1225
      %v1245 = vmul.f32 %v530, %v1225
      %v1246 = vmul.f32 %v531, %v1225
      %v1247 = vmul.f32 %v532, %v1225
      %v1248 = vmul.f32 %v533, %v1225
      %v1249 = vmul.f32 %v534, %v1225
      %v1250 = vmul.f32 %v535, %v1225
      %v1251 = vmul.f32 %v536, %v1225
      %v1252 = vmul.f32 %v537, %v1225
      %v1253 = vmul.f32 %v538, %v1225
      %v1254 = vmul.f32 %v539, %v1225
      %v1255 = vmul.f32 %v540, %v1225
      %v1256 = vmul.f32 %v541, %v1225
      %v1257 = vmul.f32 %v542, %v1225
      %v1258 = vadd.f32 %v1190, %v1226
      %v1259 = vadd.f32 %v1191, %v1227
      %v1260 = vadd.f32 %v1192, %v1228
      %v1261 = vadd.f32 %v1193, %v1229
      %v1262 = vadd.f32 %v1194, %v1230
      %v1263 = vadd.f32 %v1195, %v1231
      %v1264 = vadd.f32 %v1196, %v1232
      %v1265 = vadd.f32 %v1197, %v1233
      %v1266 = vadd.f32 %v1198, %v1234
      %v1267 = vadd.f32 %v1199, %v1235
      %v1268 = vadd.f32 %v1200, %v1236
      %v1269 = vadd.f32 %v1201, %v1237
      %v1270 = vadd.f32 %v1202, %v1238
      %v1271 = vadd.f32 %v1203, %v1239
      %v1272 = vadd.f32 %v1204, %v1240
      %v1273 = vadd.f32 %v1205, %v1241
      %v1274 = vadd.f32 %v1206, %v1242
      %v1275 = vadd.f32 %v1207, %v1243
      %v1276 = vadd.f32 %v1208, %v1244
      %v1277 = vadd.f32 %v1209, %v1245
      %v1278 = vadd.f32 %v1210, %v1246
      %v1279 = vadd.f32 %v1211, %v1247
      %v1280 = vadd.f32 %v1212, %v1248
      %v1281 = vadd.f32 %v1213, %v1249
      %v1282 = vadd.f32 %v1214, %v1250
      %v1283 = vadd.f32 %v1215, %v1251
      %v1284 = vadd.f32 %v1216, %v1252
      %v1285 = vadd.f32 %v1217, %v1253
      %v1286 = vadd.f32 %v1218, %v1254
      %v1287 = vadd.f32 %v1219, %v1255
      %v1288 = vadd.f32 %v1220, %v1256
      %v1289 = vadd.f32 %v1221, %v1257
      %v1290 = vlaneseq
      %v1291 = vshrl.u32 %v1290, 7
      %v1292 = vsub.s32 0, %v1291
      %v1293 = vrot.slane %v777, %v1292
      %v1294 = vmul.f32 %v744, %v1293
      %v1295 = vmul.f32 %v745, %v1293
      %v1296 = vmul.f32 %v746, %v1293
      %v1297 = vmul.f32 %v747, %v1293
      %v1298 = vmul.f32 %v748, %v1293
      %v1299 = vmul.f32 %v749, %v1293
      %v1300 = vmul.f32 %v750, %v1293
      %v1301 = vmul.f32 %v751, %v1293
      %v1302 = vmul.f32 %v752, %v1293
      %v1303 = vmul.f32 %v753, %v1293
      %v1304 = vmul.f32 %v754, %v1293
      %v1305 = vmul.f32 %v755, %v1293
      %v1306 = vmul.f32 %v756, %v1293
      %v1307 = vmul.f32 %v757, %v1293
      %v1308 = vmul.f32 %v758, %v1293
      %v1309 = vmul.f32 %v759, %v1293
      %v1310 = vmul.f32 %v760, %v1293
      %v1311 = vmul.f32 %v761, %v1293
      %v1312 = vmul.f32 %v762, %v1293
      %v1313 = vmul.f32 %v763, %v1293
      %v1314 = vmul.f32 %v764, %v1293
      %v1315 = vmul.f32 %v765, %v1293
      %v1316 = vmul.f32 %v766, %v1293
      %v1317 = vmul.f32 %v767, %v1293
      %v1318 = vmul.f32 %v768, %v1293
      %v1319 = vmul.f32 %v769, %v1293
      %v1320 = vmul.f32 %v770, %v1293
      %v1321 = vmul.f32 %v771, %v1293
      %v1322 = vmul.f32 %v772, %v1293
      %v1323 = vmul.f32 %v773, %v1293
      %v1324 = vmul.f32 %v774, %v1293
      %v1325 = vmul.f32 %v775, %v1293
      %v1326 = vadd.f32 %v1258, %v1294
      %v1327 = vadd.f32 %v1259, %v1295
      %v1328 = vadd.f32 %v1260, %v1296
      %v1329 = vadd.f32 %v1261, %v1297
      %v1330 = vadd.f32 %v1262, %v1298
      %v1331 = vadd.f32 %v1263, %v1299
      %v1332 = vadd.f32 %v1264, %v1300
      %v1333 = vadd.f32 %v1265, %v1301
      %v1334 = vadd.f32 %v1266, %v1302
      %v1335 = vadd.f32 %v1267, %v1303
      %v1336 = vadd.f32 %v1268, %v1304
      %v1337 = vadd.f32 %v1269, %v1305
      %v1338 = vadd.f32 %v1270, %v1306
      %v1339 = vadd.f32 %v1271, %v1307
      %v1340 = vadd.f32 %v1272, %v1308
      %v1341 = vadd.f32 %v1273, %v1309
      %v1342 = vadd.f32 %v1274, %v1310
      %v1343 = vadd.f32 %v1275, %v1311
      %v1344 = vadd.f32 %v1276, %v1312
      %v1345 = vadd.f32 %v1277, %v1313
      %v1346 = vadd.f32 %v1278, %v1314
      %v1347 = vadd.f32 %v1279, %v1315
      %v1348 = vadd.f32 %v1280, %v1316
      %v1349 = vadd.f32 %v1281, %v1317
      %v1350 = vadd.f32 %v1282, %v1318
      %v1351 = vadd.f32 %v1283, %v1319
      %v1352 = vadd.f32 %v1284, %v1320
      %v1353 = vadd.f32 %v1285, %v1321
      %v1354 = vadd.f32 %v1286, %v1322
      %v1355 = vadd.f32 %v1287, %v1323
      %v1356 = vadd.f32 %v1288, %v1324
      %v1357 = vadd.f32 %v1289, %v1325
      %v1358 = vmax.f32 %v1326, 0.0
      %v1359 = vmax.f32 %v1327, 0.0
      %v1360 = vmax.f32 %v1328, 0.0
      %v1361 = vmax.f32 %v1329, 0.0
      %v1362 = vmax.f32 %v1330, 0.0
      %v1363 = vmax.f32 %v1331, 0.0
      %v1364 = vmax.f32 %v1332, 0.0
      %v1365 = vmax.f32 %v1333, 0.0
      %v1366 = vmax.f32 %v1334, 0.0
      %v1367 = vmax.f32 %v1335, 0.0
      %v1368 = vmax.f32 %v1336, 0.0
      %v1369 = vmax.f32 %v1337, 0.0
      %v1370 = vmax.f32 %v1338, 0.0
      %v1371 = vmax.f32 %v1339, 0.0
      %v1372 = vmax.f32 %v1340, 0.0
      %v1373 = vmax.f32 %v1341, 0.0
      %v1374 = vmax.f32 %v1342, 0.0
      %v1375 = vmax.f32 %v1343, 0.0
      %v1376 = vmax.f32 %v1344, 0.0
      %v1377 = vmax.f32 %v1345, 0.0
      %v1378 = vmax.f32 %v1346, 0.0
      %v1379 = vmax.f32 %v1347, 0.0
      %v1380 = vmax.f32 %v1348, 0.0
      %v1381 = vmax.f32 %v1349, 0.0
      %v1382 = vmax.f32 %v1350, 0.0
      %v1383 = vmax.f32 %v1351, 0.0
      %v1384 = vmax.f32 %v1352, 0.0
      %v1385 = vmax.f32 %v1353, 0.0
      %v1386 = vmax.f32 %v1354, 0.0
      %v1387 = vmax.f32 %v1355, 0.0
      %v1388 = vmax.f32 %v1356, 0.0
      %v1389 = vmax.f32 %v1357, 0.0
      %v1390 = vmin.f32 %v1358, 6.0
      %v1391 = vmin.f32 %v1359, 6.0
      %v1392 = vmin.f32 %v1360, 6.0
      %v1393 = vmin.f32 %v1361, 6.0
      %v1394 = vmin.f32 %v1362, 6.0
      %v1395 = vmin.f32 %v1363, 6.0
      %v1396 = vmin.f32 %v1364, 6.0
      %v1397 = vmin.f32 %v1365, 6.0
      %v1398 = vmin.f32 %v1366, 6.0
      %v1399 = vmin.f32 %v1367, 6.0
      %v1400 = vmin.f32 %v1368, 6.0
      %v1401 = vmin.f32 %v1369, 6.0
      %v1402 = vmin.f32 %v1370, 6.0
      %v1403 = vmin.f32 %v1371, 6.0
      %v1404 = vmin.f32 %v1372, 6.0
      %v1405 = vmin.f32 %v1373, 6.0
      %v1406 = vmin.f32 %v1374, 6.0
      %v1407 = vmin.f32 %v1375, 6.0
      %v1408 = vmin.f32 %v1376, 6.0
      %v1409 = vmin.f32 %v1377, 6.0
      %v1410 = vmin.f32 %v1378, 6.0
      %v1411 = vmin.f32 %v1379, 6.0
      %v1412 = vmin.f32 %v1380, 6.0
      %v1413 = vmin.f32 %v1381, 6.0
      %v1414 = vmin.f32 %v1382, 6.0
      %v1415 = vmin.f32 %v1383, 6.0
      %v1416 = vmin.f32 %v1384, 6.0
      %v1417 = vmin.f32 %v1385, 6.0
      %v1418 = vmin.f32 %v1386, 6.0
      %v1419 = vmin.f32 %v1387, 6.0
      %v1420 = vmin.f32 %v1388, 6.0
      %v1421 = vmin.f32 %v1389, 6.0
      %v1422 = vld [vmem:[%s4] sm:$0xf]
      %v1423 = vld [vmem:[%s5] sm:$0x1]
      %v1425 = vlaneseq
      %v1426 = vshrl.u32 %v1425, 7
      %v1427 = vsub.s32 0, %v1426
      %v1428 = vrot.slane %v1423, %v1427
      %v1431 = vsel %vm453, %v1390, 0
      %v1434 = vsel %vm453, %v1391, 0
      %v1437 = vsel %vm453, %v1392, 0
      %v1440 = vsel %vm453, %v1393, 0
      %v1443 = vsel %vm453, %v1394, 0
      %v1446 = vsel %vm453, %v1395, 0
      %v1449 = vsel %vm453, %v1396, 0
      %v1452 = vsel %vm453, %v1397, 0
      %v1455 = vsel %vm453, %v1398, 0
      %v1458 = vsel %vm453, %v1399, 0
      %v1461 = vsel %vm453, %v1400, 0
      %v1464 = vsel %vm453, %v1401, 0
      %v1467 = vsel %vm453, %v1402, 0
      %v1470 = vsel %vm453, %v1403, 0
      %v1473 = vsel %vm453, %v1404, 0
      %v1476 = vsel %vm453, %v1405, 0
      %v1479 = vsel %vm453, %v1406, 0
      %v1482 = vsel %vm453, %v1407, 0
      %v1485 = vsel %vm453, %v1408, 0
      %v1488 = vsel %vm453, %v1409, 0
      %v1491 = vsel %vm453, %v1410, 0
      %v1494 = vsel %vm453, %v1411, 0
      %v1497 = vsel %vm453, %v1412, 0
      %v1500 = vsel %vm453, %v1413, 0
      %v1503 = vsel %vm453, %v1414, 0
      %v1506 = vsel %vm453, %v1415, 0
      %v1509 = vsel %vm453, %v1416, 0
      %v1512 = vsel %vm453, %v1417, 0
      %v1515 = vsel %vm453, %v1418, 0
      %v1518 = vsel %vm453, %v1419, 0
      %v1521 = vsel %vm453, %v1420, 0
      %v1524 = vsel %vm453, %v1421, 0
      %vm1526 = vcmask 1043456
      %v1528 = vsel %vm1526, %v1422, 0
      %1530 = vmatprep.subr.mxu0 0.0
      %1531 = vmatpush1.msra.mxu0 %v1528
      %1532 = vmatprep.subr.mxu0 0.0
      %1533 = vmatpush1.msra.mxu0 0.0
      %1534 = vmatprep.subr.mxu0 0.0
      %1535 = vmatpush1.msra.mxu0 0.0
      %1536 = vmatprep.subr.mxu0 0.0
      %1537 = vmatpush1.msra.mxu0 0.0
      %1538 = vmatprep.subr.mxu0 0.0
      %1539 = vmatpush1.msra.mxu0 0.0
      %1540 = vmatprep.subr.mxu0 0.0
      %1541 = vmatpush1.msra.mxu0 0.0
      %1542 = vmatprep.subr.mxu0 0.0
      %1543 = vmatpush1.msra.mxu0 0.0
      %1544 = vmatprep.subr.mxu0 0.0
      %1545 = vmatpush1.msra.mxu0 0.0
      %1546 = vmatprep.subr.mxu0 0.0
      %1547 = vmatpush1.msra.mxu0 0.0
      %1548 = vmatprep.subr.mxu0 0.0
      %1549 = vmatpush1.msra.mxu0 0.0
      %1550 = vmatprep.subr.mxu0 0.0
      %1551 = vmatpush1.msra.mxu0 0.0
      %1552 = vmatprep.subr.mxu0 0.0
      %1553 = vmatpush1.msra.mxu0 0.0
      %1554 = vmatprep.subr.mxu0 0.0
      %1555 = vmatpush1.msra.mxu0 0.0
      %1556 = vmatprep.subr.mxu0 0.0
      %1557 = vmatpush1.msra.mxu0 0.0
      %1558 = vmatprep.subr.mxu0 0.0
      %1559 = vmatpush1.msra.mxu0 0.0
      %1560 = vmatprep.subr.mxu0 0.0
      %1561 = vmatpush1.msra.mxu0 0.0
      %1562 = vmatprep.subr.mxu0 0.0
      %1563 = vmatpush1.msra.mxu0 0.0
      %1564 = vmatprep.subr.mxu0 0.0
      %1565 = vmatpush1.msra.mxu0 0.0
      %1566 = vmatprep.subr.mxu0 0.0
      %1567 = vmatpush1.msra.mxu0 0.0
      %1568 = vmatprep.subr.mxu0 0.0
      %1569 = vmatpush1.msra.mxu0 0.0
      %1570 = vmatprep.subr.mxu0 0.0
      %1571 = vmatpush1.msra.mxu0 0.0
      %1572 = vmatprep.subr.mxu0 0.0
      %1573 = vmatpush1.msra.mxu0 0.0
      %1574 = vmatprep.subr.mxu0 0.0
      %1575 = vmatpush1.msra.mxu0 0.0
      %1576 = vmatprep.subr.mxu0 0.0
      %1577 = vmatpush1.msra.mxu0 0.0
      %1578 = vmatprep.subr.mxu0 0.0
      %1579 = vmatpush1.msra.mxu0 0.0
      %1580 = vmatprep.subr.mxu0 0.0
      %1581 = vmatpush1.msra.mxu0 0.0
      %1582 = vmatprep.subr.mxu0 0.0
      %1583 = vmatpush1.msra.mxu0 0.0
      %1584 = vmatprep.subr.mxu0 0.0
      %1585 = vmatpush1.msra.mxu0 0.0
      %1586 = vmatprep.subr.mxu0 0.0
      %1587 = vmatpush1.msra.mxu0 0.0
      %1588 = vmatprep.subr.mxu0 0.0
      %1589 = vmatpush1.msra.mxu0 0.0
      %1590 = vmatprep.subr.mxu0 0.0
      %1591 = vmatpush1.msra.mxu0 0.0
      %1592 = vmatprep.subr.mxu0 0.0
      %1593 = vmatpush1.msra.mxu0 0.0
      %1594 = vmatprep.mubr.f32.mxu0 0.0
      %1595 = vmatmul.mubr.f32.gmra.mrb[0].mxu0 %v1431
      %v1596 = vpop.f32.mrb[0].mxu0
      %v1597 = vadd.f32 %v1428, %v1596
      %v1598 = vpop.f32.mrb[0].mxu0
      %1599 = vmatprep.mubr.f32.mxu0 0.0
      %1600 = vmatmul.mubr.f32.gmra.mrb[0].mxu0 %v1434
      %v1601 = vpop.f32.mrb[0].mxu0
      %v1602 = vadd.f32 %v1428, %v1601
      %v1603 = vpop.f32.mrb[0].mxu0
      %1604 = vmatprep.mubr.f32.mxu0 0.0
      %1605 = vmatmul.mubr.f32.gmra.mrb[0].mxu0 %v1437
      %v1606 = vpop.f32.mrb[0].mxu0
      %v1607 = vadd.f32 %v1428, %v1606
      %v1608 = vpop.f32.mrb[0].mxu0
      %1609 = vmatprep.mubr.f32.mxu0 0.0
      %1610 = vmatmul.mubr.f32.gmra.mrb[0].mxu0 %v1440
      %v1611 = vpop.f32.mrb[0].mxu0
      %v1612 = vadd.f32 %v1428, %v1611
      %v1613 = vpop.f32.mrb[0].mxu0
      %1614 = vmatprep.mubr.f32.mxu0 0.0
      %1615 = vmatmul.mubr.f32.gmra.mrb[0].mxu0 %v1443
      %v1616 = vpop.f32.mrb[0].mxu0
      %v1617 = vadd.f32 %v1428, %v1616
      %v1618 = vpop.f32.mrb[0].mxu0
      %1619 = vmatprep.mubr.f32.mxu0 0.0
      %1620 = vmatmul.mubr.f32.gmra.mrb[0].mxu0 %v1446
      %v1621 = vpop.f32.mrb[0].mxu0
      %v1622 = vadd.f32 %v1428, %v1621
      %v1623 = vpop.f32.mrb[0].mxu0
      %1624 = vmatprep.mubr.f32.mxu0 0.0
      %1625 = vmatmul.mubr.f32.gmra.mrb[0].mxu0 %v1449
      %v1626 = vpop.f32.mrb[0].mxu0
      %v1627 = vadd.f32 %v1428, %v1626
      %v1628 = vpop.f32.mrb[0].mxu0
      %1629 = vmatprep.mubr.f32.mxu0 0.0
      %1630 = vmatmul.mubr.f32.gmra.mrb[0].mxu0 %v1452
      %v1631 = vpop.f32.mrb[0].mxu0
      %v1632 = vadd.f32 %v1428, %v1631
      %v1633 = vpop.f32.mrb[0].mxu0
      %1634 = vmatprep.mubr.f32.mxu0 0.0
      %1635 = vmatmul.mubr.f32.gmra.mrb[0].mxu0 %v1455
      %v1636 = vpop.f32.mrb[0].mxu0
      %v1637 = vadd.f32 %v1428, %v1636
      %v1638 = vpop.f32.mrb[0].mxu0
      %1639 = vmatprep.mubr.f32.mxu0 0.0
      %1640 = vmatmul.mubr.f32.gmra.mrb[0].mxu0 %v1458
      %v1641 = vpop.f32.mrb[0].mxu0
      %v1642 = vadd.f32 %v1428, %v1641
      %v1643 = vpop.f32.mrb[0].mxu0
      %1644 = vmatprep.mubr.f32.mxu0 0.0
      %1645 = vmatmul.mubr.f32.gmra.mrb[0].mxu0 %v1461
      %v1646 = vpop.f32.mrb[0].mxu0
      %v1647 = vadd.f32 %v1428, %v1646
      %v1648 = vpop.f32.mrb[0].mxu0
      %1649 = vmatprep.mubr.f32.mxu0 0.0
      %1650 = vmatmul.mubr.f32.gmra.mrb[0].mxu0 %v1464
      %v1651 = vpop.f32.mrb[0].mxu0
      %v1652 = vadd.f32 %v1428, %v1651
      %v1653 = vpop.f32.mrb[0].mxu0
      %1654 = vmatprep.mubr.f32.mxu0 0.0
      %1655 = vmatmul.mubr.f32.gmra.mrb[0].mxu0 %v1467
      %v1656 = vpop.f32.mrb[0].mxu0
      %v1657 = vadd.f32 %v1428, %v1656
      %v1658 = vpop.f32.mrb[0].mxu0
      %1659 = vmatprep.mubr.f32.mxu0 0.0
      %1660 = vmatmul.mubr.f32.gmra.mrb[0].mxu0 %v1470
      %v1661 = vpop.f32.mrb[0].mxu0
      %v1662 = vadd.f32 %v1428, %v1661
      %v1663 = vpop.f32.mrb[0].mxu0
      %1664 = vmatprep.mubr.f32.mxu0 0.0
      %1665 = vmatmul.mubr.f32.gmra.mrb[0].mxu0 %v1473
      %v1666 = vpop.f32.mrb[0].mxu0
      %v1667 = vadd.f32 %v1428, %v1666
      %v1668 = vpop.f32.mrb[0].mxu0
      %1669 = vmatprep.mubr.f32.mxu0 0.0
      %1670 = vmatmul.mubr.f32.gmra.mrb[0].mxu0 %v1476
      %v1671 = vpop.f32.mrb[0].mxu0
      %v1672 = vadd.f32 %v1428, %v1671
      %v1673 = vpop.f32.mrb[0].mxu0
      %1674 = vmatprep.mubr.f32.mxu0 0.0
      %1675 = vmatmul.mubr.f32.gmra.mrb[0].mxu0 %v1479
      %v1676 = vpop.f32.mrb[0].mxu0
      %v1677 = vadd.f32 %v1428, %v1676
      %v1678 = vpop.f32.mrb[0].mxu0
      %1679 = vmatprep.mubr.f32.mxu0 0.0
      %1680 = vmatmul.mubr.f32.gmra.mrb[0].mxu0 %v1482
      %v1681 = vpop.f32.mrb[0].mxu0
      %v1682 = vadd.f32 %v1428, %v1681
      %v1683 = vpop.f32.mrb[0].mxu0
      %1684 = vmatprep.mubr.f32.mxu0 0.0
      %1685 = vmatmul.mubr.f32.gmra.mrb[0].mxu0 %v1485
      %v1686 = vpop.f32.mrb[0].mxu0
      %v1687 = vadd.f32 %v1428, %v1686
      %v1688 = vpop.f32.mrb[0].mxu0
      %1689 = vmatprep.mubr.f32.mxu0 0.0
      %1690 = vmatmul.mubr.f32.gmra.mrb[0].mxu0 %v1488
      %v1691 = vpop.f32.mrb[0].mxu0
      %v1692 = vadd.f32 %v1428, %v1691
      %v1693 = vpop.f32.mrb[0].mxu0
      %1694 = vmatprep.mubr.f32.mxu0 0.0
      %1695 = vmatmul.mubr.f32.gmra.mrb[0].mxu0 %v1491
      %v1696 = vpop.f32.mrb[0].mxu0
      %v1697 = vadd.f32 %v1428, %v1696
      %v1698 = vpop.f32.mrb[0].mxu0
      %1699 = vmatprep.mubr.f32.mxu0 0.0
      %1700 = vmatmul.mubr.f32.gmra.mrb[0].mxu0 %v1494
      %v1701 = vpop.f32.mrb[0].mxu0
      %v1702 = vadd.f32 %v1428, %v1701
      %v1703 = vpop.f32.mrb[0].mxu0
      %1704 = vmatprep.mubr.f32.mxu0 0.0
      %1705 = vmatmul.mubr.f32.gmra.mrb[0].mxu0 %v1497
      %v1706 = vpop.f32.mrb[0].mxu0
      %v1707 = vadd.f32 %v1428, %v1706
      %v1708 = vpop.f32.mrb[0].mxu0
      %1709 = vmatprep.mubr.f32.mxu0 0.0
      %1710 = vmatmul.mubr.f32.gmra.mrb[0].mxu0 %v1500
      %v1711 = vpop.f32.mrb[0].mxu0
      %v1712 = vadd.f32 %v1428, %v1711
      %v1713 = vpop.f32.mrb[0].mxu0
      %1714 = vmatprep.mubr.f32.mxu0 0.0
      %1715 = vmatmul.mubr.f32.gmra.mrb[0].mxu0 %v1503
      %v1716 = vpop.f32.mrb[0].mxu0
      %v1717 = vadd.f32 %v1428, %v1716
      %v1718 = vpop.f32.mrb[0].mxu0
      %1719 = vmatprep.mubr.f32.mxu0 0.0
      %1720 = vmatmul.mubr.f32.gmra.mrb[0].mxu0 %v1506
      %v1721 = vpop.f32.mrb[0].mxu0
      %v1722 = vadd.f32 %v1428, %v1721
      %v1723 = vpop.f32.mrb[0].mxu0
      %1724 = vmatprep.mubr.f32.mxu0 0.0
      %1725 = vmatmul.mubr.f32.gmra.mrb[0].mxu0 %v1509
      %v1726 = vpop.f32.mrb[0].mxu0
      %v1727 = vadd.f32 %v1428, %v1726
      %v1728 = vpop.f32.mrb[0].mxu0
      %1729 = vmatprep.mubr.f32.mxu0 0.0
      %1730 = vmatmul.mubr.f32.gmra.mrb[0].mxu0 %v1512
      %v1731 = vpop.f32.mrb[0].mxu0
      %v1732 = vadd.f32 %v1428, %v1731
      %v1733 = vpop.f32.mrb[0].mxu0
      %1734 = vmatprep.mubr.f32.mxu0 0.0
      %1735 = vmatmul.mubr.f32.gmra.mrb[0].mxu0 %v1515
      %v1736 = vpop.f32.mrb[0].mxu0
      %v1737 = vadd.f32 %v1428, %v1736
      %v1738 = vpop.f32.mrb[0].mxu0
      %1739 = vmatprep.mubr.f32.mxu0 0.0
      %1740 = vmatmul.mubr.f32.gmra.mrb[0].mxu0 %v1518
      %v1741 = vpop.f32.mrb[0].mxu0
      %v1742 = vadd.f32 %v1428, %v1741
      %v1743 = vpop.f32.mrb[0].mxu0
      %1744 = vmatprep.mubr.f32.mxu0 0.0
      %1745 = vmatmul.mubr.f32.gmra.mrb[0].mxu0 %v1521
      %v1746 = vpop.f32.mrb[0].mxu0
      %v1747 = vadd.f32 %v1428, %v1746
      %v1748 = vpop.f32.mrb[0].mxu0
      %1749 = vmatprep.mubr.f32.mxu0 0.0
      %1750 = vmatmul.mubr.f32.gmra.mrb[0].mxu0 %v1524
      %v1751 = vpop.f32.mrb[0].mxu0
      %v1752 = vadd.f32 %v1428, %v1751
      %v1753 = vpop.f32.mrb[0].mxu0
      %1754 = vdwg.mxu0
      %v1755 = vadd.f32 %v1597, %v420
      %v1756 = vadd.f32 %v1602, %v421
      %v1757 = vadd.f32 %v1607, %v422
      %v1758 = vadd.f32 %v1612, %v423
      %v1759 = vadd.f32 %v1617, %v424
      %v1760 = vadd.f32 %v1622, %v425
      %v1761 = vadd.f32 %v1627, %v426
      %v1762 = vadd.f32 %v1632, %v427
      %v1763 = vadd.f32 %v1637, %v428
      %v1764 = vadd.f32 %v1642, %v429
      %v1765 = vadd.f32 %v1647, %v430
      %v1766 = vadd.f32 %v1652, %v431
      %v1767 = vadd.f32 %v1657, %v432
      %v1768 = vadd.f32 %v1662, %v433
      %v1769 = vadd.f32 %v1667, %v434
      %v1770 = vadd.f32 %v1672, %v435
      %v1771 = vadd.f32 %v1677, %v436
      %v1772 = vadd.f32 %v1682, %v437
      %v1773 = vadd.f32 %v1687, %v438
      %v1774 = vadd.f32 %v1692, %v439
      %v1775 = vadd.f32 %v1697, %v440
      %v1776 = vadd.f32 %v1702, %v441
      %v1777 = vadd.f32 %v1707, %v442
      %v1778 = vadd.f32 %v1712, %v443
      %v1779 = vadd.f32 %v1717, %v444
      %v1780 = vadd.f32 %v1722, %v445
      %v1781 = vadd.f32 %v1727, %v446
      %v1782 = vadd.f32 %v1732, %v447
      %v1783 = vadd.f32 %v1737, %v448
      %v1784 = vadd.f32 %v1742, %v449
      %v1785 = vadd.f32 %v1747, %v450
      %v1786 = vadd.f32 %v1752, %v451
      %1787 = vst.msk [vmem:[%s418] sm:$0xff] %vm453, %v1755
      %1788 = vst.msk [vmem:[%s418 + $0x8] sm:$0xff] %vm453, %v1756
      %1789 = vst.msk [vmem:[%s418 + $0x10] sm:$0xff] %vm453, %v1757
      %1790 = vst.msk [vmem:[%s418 + $0x18] sm:$0xff] %vm453, %v1758
      %1791 = vst.msk [vmem:[%s418 + $0x20] sm:$0xff] %vm453, %v1759
      %1792 = vst.msk [vmem:[%s418 + $0x28] sm:$0xff] %vm453, %v1760
      %1793 = vst.msk [vmem:[%s418 + $0x30] sm:$0xff] %vm453, %v1761
      %1794 = vst.msk [vmem:[%s418 + $0x38] sm:$0xff] %vm453, %v1762
      %1795 = vst.msk [vmem:[%s418 + $0x40] sm:$0xff] %vm453, %v1763
      %1796 = vst.msk [vmem:[%s418 + $0x48] sm:$0xff] %vm453, %v1764
      %1797 = vst.msk [vmem:[%s418 + $0x50] sm:$0xff] %vm453, %v1765
      %1798 = vst.msk [vmem:[%s418 + $0x58] sm:$0xff] %vm453, %v1766
      %1799 = vst.msk [vmem:[%s418 + $0x60] sm:$0xff] %vm453, %v1767
      %1800 = vst.msk [vmem:[%s418 + $0x68] sm:$0xff] %vm453, %v1768
      %1801 = vst.msk [vmem:[%s418 + $0x70] sm:$0xff] %vm453, %v1769
      %1802 = vst.msk [vmem:[%s418 + $0x78] sm:$0xff] %vm453, %v1770
      %1803 = vst.msk [vmem:[%s418 + $0x80] sm:$0xff] %vm453, %v1771
      %1804 = vst.msk [vmem:[%s418 + $0x88] sm:$0xff] %vm453, %v1772
      %1805 = vst.msk [vmem:[%s418 + $0x90] sm:$0xff] %vm453, %v1773
      %1806 = vst.msk [vmem:[%s418 + $0x98] sm:$0xff] %vm453, %v1774
      %1807 = vst.msk [vmem:[%s418 + $0xa0] sm:$0xff] %vm453, %v1775
      %1808 = vst.msk [vmem:[%s418 + $0xa8] sm:$0xff] %vm453, %v1776
      %1809 = vst.msk [vmem:[%s418 + $0xb0] sm:$0xff] %vm453, %v1777
      %1810 = vst.msk [vmem:[%s418 + $0xb8] sm:$0xff] %vm453, %v1778
      %1811 = vst.msk [vmem:[%s418 + $0xc0] sm:$0xff] %vm453, %v1779
      %1812 = vst.msk [vmem:[%s418 + $0xc8] sm:$0xff] %vm453, %v1780
      %1813 = vst.msk [vmem:[%s418 + $0xd0] sm:$0xff] %vm453, %v1781
      %1814 = vst.msk [vmem:[%s418 + $0xd8] sm:$0xff] %vm453, %v1782
      %1815 = vst.msk [vmem:[%s418 + $0xe0] sm:$0xff] %vm453, %v1783
      %1816 = vst.msk [vmem:[%s418 + $0xe8] sm:$0xff] %vm453, %v1784
      %1817 = vst.msk [vmem:[%s418 + $0xf0] sm:$0xff] %vm453, %v1785
      %1818 = vst.msk [vmem:[%s418 + $0xf8] sm:$0xff] %vm453, %v1786
      %s1819 = smul.u32 16, %s22
      %p1820 = scmp.lt.s32.totalorder %s21, 1
      %s1821 = scalar_select %p1820, %s21, 1
      %p1822 = scmp.lt.s32.totalorder %s1819, 15
      %s1823 = scalar_select %p1822, %s1819, 15
      %s1824 = smul.addr %s1823, 2
      %s1825 = smul.addr %s1821, 32
      %s1826 = sadd.s32 %s1824, %s1825
      %s1827 = smul.addr %s1826, 8
      %s1828 = scalar_lea.vmem %s6, %s1827
      // Predicated region
      $region45: #{tpu_custom_call.1} parent=43 // pred_check
        %p1829 = pneg %p212
      $region46: #{tpu_custom_call.1} parent=43 // pred_check_branch
        %1831 = sbr.rel (%p1829) target = $region48
      $region47: #{tpu_custom_call.1} parent=43 // pred_region
        %s1832 = smul.u32 16, %s22
      $region48: #{tpu_custom_call.1} parent=43 // pred_fallthru
        _
    $region44: #{tpu_custom_call.1} parent=5 // pred_fallthru
      _
    %p1833 = scmp.le.s32.totalorder 2, %s12
    // Predicated region
    $region49: #{tpu_custom_call.1} parent=5 // pred_check
      %p1834 = pneg %p1833
    $region50: #{tpu_custom_call.1} parent=5 // pred_check_branch
      %1836 = sbr.rel (%p1834) target = $region52
    $region51: #{tpu_custom_call.1} parent=5 // pred_region
      %s1837 = ssub.s32 %s12, 2
      // Predicated region
      $region53: #{tpu_custom_call.1} parent=51 // pred_check
        %p1838 = pneg %p218
      $region54: #{tpu_custom_call.1} parent=51 // pred_check_branch
        %1840 = sbr.rel (%p1838) target = $region56
      $region55: #{tpu_custom_call.1} parent=51 // pred_region
        %s1841 = smul.u32 16, %s24
        %p1842 = scmp.lt.s32.totalorder %s23, 1
        %s1843 = scalar_select %p1842, %s23, 1
        %p1844 = scmp.lt.s32.totalorder %s1841, 15
        %s1845 = scalar_select %p1844, %s1841, 15
        %s1846 = smul.addr %s1845, 2
        %s1847 = smul.addr %s1843, 32
        %s1848 = sadd.s32 %s1846, %s1847
        %s1849 = smul.addr %s1848, 8
        %s1850 = scalar_lea.vmem %s6, %s1849
      $region56: #{tpu_custom_call.1} parent=51 // pred_fallthru
        _
    $region52: #{tpu_custom_call.1} parent=5 // pred_fallthru
      _
  $region6: #{tpu_custom_call.1} parent=0 // loop_footer
    %s16 = sadd.s32 1, %s12
  $region7: #{tpu_custom_call.1} parent=0 // loop_footer_branch
    %11 = sbr.rel target = $region3
  $region8: #{tpu_custom_call.1} parent=0 // loop_exit
    _

</llo_original>
